<compile_context>
chip_gen: v7x
topology: tpu7x:2x2x1
jax: 0.10.0
libtpu: 0.0.40
codegen_flags: <defaults>
</compile_context>

<pallas_src>
import jax
import jax.numpy as jnp
from jax import lax
from jax.experimental import pallas as pl
from jax.experimental.pallas import tpu as pltpu


LANE = 128     # gate stride / hidden pad (use 256 on v6e/v7x if hidden size grows)
SUBLANE = 8    # f32 sublane height


def _round_up(x, m):
    return ((x + m - 1) // m) * m


# ----------------------------- Pallas kernel -------------------------------
def bigru_kernel(
    ids_ref,      # (T*Bp, 1) int32  time-major flattened token ids
    emb_ref,      # (Vp, Ep)         embedding table (zero-padded)
    wih_ref,      # (Ep, 6G)         input->hidden weights, both directions, gate-padded
    gib_ref,      # (1, 6G)          folded input-projection biases
    whh_f_ref,    # (G, 3G)          forward hidden->hidden weight (gate-padded)
    bhhn_f_ref,   # (1, G)           forward b_hh for the n-gate (r-scaled in the cell)
    bhhn_b_ref,   # (1, G)           backward b_hh for the n-gate
    wfc_ref,      # (2G, Cp)         classifier weight (rows [fwd | bwd], zero-padded)
    bfc_ref,      # (1, Cp)
    out_ref,      # (Bp, Cp)         logits, lane-dense padded output
):
    TB = ids_ref.shape[0]
    Vp, _Ep = emb_ref.shape
    G = wih_ref.shape[1] // 6
    Bp = out_ref.shape[0]
    T = TB // Bp

    # ---- Fused prologue (off the recurrence critical path) ------------------
    # Embedding gather as an exact one-hot MXU matmul (one nonzero per row),
    # then the bulk input projection for BOTH directions and ALL timesteps with
    # the biases pre-folded.  gi stays in VMEM for the whole kernel.
    onehot = (ids_ref[...] ==
              lax.broadcasted_iota(jnp.int32, (TB, Vp), 1)).astype(jnp.float32)
    x = jnp.dot(onehot, emb_ref[...], preferred_element_type=jnp.float32)     # (TB, Ep)
    gi_all = (jnp.dot(x, wih_ref[...], preferred_element_type=jnp.float32)
              + gib_ref[...])                                                  # (TB, 6G)

    # Loop-invariant loads / broadcasts hoisted out of the recurrence.
    whh_f = whh_f_ref[...]                                    # (G, 3G)
    bhhn_f = jnp.broadcast_to(bhhn_f_ref[...], (Bp, G))
    bhhn_b = jnp.broadcast_to(bhhn_b_ref[...], (Bp, G))

    def gru_step(gi_t, h):
        # Only h @ Whh sits on the serial critical path; gate slices are
        # 128-lane aligned (gate stride == G) -> pure vreg selection.
        gh = jnp.dot(h, whh_f, preferred_element_type=jnp.float32)            # (Bp, 3G)
        r = jax.nn.sigmoid(gi_t[:, 0:G] + gh[:, 0:G])
        z = jax.nn.sigmoid(gi_t[:, G:2 * G] + gh[:, G:2 * G])
        n = jnp.tanh(gi_t[:, 2 * G:3 * G] + r * (gh[:, 2 * G:3 * G] + bhhn_f))
        return (1.0 - z) * n + z * h

    # Forward recurrence, statically unrolled (T small & static).  Row slices
    # are sublane-aligned (Bp multiple of 8) and gate slices lane-aligned.
    h = jnp.zeros((Bp, G), jnp.float32)
    for t in range(T):
        h = gru_step(gi_all[t * Bp:(t + 1) * Bp, 0:3 * G], h)
    h_fwd = h

    # Backward direction at the *last* timestep == one reverse-GRU step from
    # h0 = 0, so its h @ Whh_b term is identically zero and is skipped.
    gi_b = gi_all[(T - 1) * Bp:T * Bp, 3 * G:6 * G]
    r_b = jax.nn.sigmoid(gi_b[:, 0:G])
    z_b = jax.nn.sigmoid(gi_b[:, G:2 * G])
    n_b = jnp.tanh(gi_b[:, 2 * G:3 * G] + r_b * bhhn_b)
    h_bwd = (1.0 - z_b) * n_b

    # Dropout(p=0.5) is identity at inference time.
    # TODO(synk): training-mode dropout (pltpu.prng_* mask) not implemented.

    # Classifier: single MXU dot over the lane-concat [h_fwd | h_bwd]
    # (two adjacent 128-lane vregs -> no XLU shuffle), lane-dense padded output.
    h_cat = jnp.concatenate([h_fwd, h_bwd], axis=-1)                           # (Bp, 2G)
    logits = (jnp.dot(h_cat, wfc_ref[...], preferred_element_type=jnp.float32)
              + bfc_ref[...])
    out_ref[...] = logits.astype(out_ref.dtype)


# --------------------------- parameter packing -------------------------------
def pack_params(params):
    """Pad gates/hidden/vocab to TPU-friendly shapes and pre-fold biases.

    Must remain the only packing entry point: the recurrence relies on the
    padded hidden lanes staying exactly zero (zero pads in whh / biases / wih /
    wfc rows).  NOTE(v6e/v7x): weights could be stored bf16 here (accumulation
    stays f32 via preferred_element_type); kept f32 to preserve the 1e-4 check.
    """
    E, H3 = params["wih_f_t"].shape
    H = H3 // 3
    V = params["embedding"].shape[0]
    C = params["wfc_t"].shape[1]
    G = _round_up(H, LANE)
    Cp = _round_up(C, LANE)
    Vp = _round_up(V, LANE)
    Ep = _round_up(E, SUBLANE)
    f32 = jnp.float32

    def pad_gate_cols(w):
        # (E, 3H) gate-blocked [r|z|n] -> (Ep, 3G), gate g in cols [g*G, g*G + H)
        out = jnp.zeros((Ep, 3 * G), f32)
        for g in range(3):
            out = out.at[:E, g * G:g * G + H].set(w[:, g * H:(g + 1) * H])
        return out

    def fold_gi_bias(bih, bhh):
        # r, z gates: b_ih + b_hh ; n gate: b_ih only (b_hh_n is r-scaled later)
        b = jnp.zeros((1, 3 * G), f32)
        b = b.at[:, 0:H].set(bih[:, 0:H] + bhh[:, 0:H])
        b = b.at[:, G:G + H].set(bih[:, H:2 * H] + bhh[:, H:2 * H])
        b = b.at[:, 2 * G:2 * G + H].set(bih[:, 2 * H:3 * H])
        return b

    def pad_vec(v):  # (1, H) -> (1, G)
        return jnp.zeros((1, G), f32).at[:, :H].set(v)

    def pad_whh(w):  # (H, 3H) -> (G, 3G); zero rows/cols keep padded h lanes at 0
        out = jnp.zeros((G, 3 * G), f32)
        for g in range(3):
            out = out.at[:H, g * G:g * G + H].set(w[:, g * H:(g + 1) * H])
        return out

    emb = jnp.zeros((Vp, Ep), f32).at[:V, :E].set(params["embedding"].astype(f32))

    wih_all = jnp.concatenate(
        [pad_gate_cols(params["wih_f_t"]), pad_gate_cols(params["wih_b_t"])], axis=1)
    gi_bias_all = jnp.concatenate(
        [fold_gi_bias(params["bih_f"], params["bhh_f"]),
         fold_gi_bias(params["bih_b"], params["bhh_b"])], axis=1)

    wfc = jnp.zeros((2 * G, Cp), f32)
    wfc = wfc.at[0:H, :C].set(params["wfc_t"][0:H])
    wfc = wfc.at[G:G + H, :C].set(params["wfc_t"][H:2 * H])
    bfc = jnp.zeros((1, Cp), f32).at[:, :C].set(params["bfc"])

    return {
        "G": G, "Cp": Cp, "C": C, "H": H, "Vp": Vp, "Ep": Ep,
        "emb": emb, "wih_all": wih_all, "gi_bias_all": gi_bias_all,
        "whh_f": pad_whh(params["whh_f_t"]),
        "bhhn_f": pad_vec(params["bhh_f"][:, 2 * H:3 * H]),
        "bhhn_b": pad_vec(params["bhh_b"][:, 2 * H:3 * H]),
        "wfc": wfc, "bfc": bfc,
    }


# ------------------------------ wrapper -------------------------------------
def bigru_pallas(input_ids, params, packed=None):
    """input_ids: (B, T) int -> logits (B, num_classes).

    Everything except a tiny int32 batch-pad / transpose of the token ids runs
    inside one pallas_call (gather, projections, recurrence, classifier).
    """
    if packed is None:
        packed = pack_params(params)
    Cp, C = packed["Cp"], packed["C"]
    B, T = input_ids.shape

    # Pad batch to full f32 sublane height: the recurrence is latency-bound on T
    # serial MXU pushes, so the padded rows ride along for free.
    Bp = max(_round_up(B, SUBLANE), SUBLANE)
    ids = jnp.zeros((Bp, T), jnp.int32).at[:B].set(input_ids.astype(jnp.int32))
    # Time-major flatten: row t*Bp + b -> token of sequence b at time t, so the
    # kernel's per-step row block gi_all[t*Bp:(t+1)*Bp] is contiguous.
    ids_flat = ids.T.reshape(T * Bp, 1)

    vmem = pl.BlockSpec(memory_space=pltpu.MemorySpace.VMEM)
    fn = pl.pallas_call(
        bigru_kernel,
        out_shape=jax.ShapeDtypeStruct((Bp, Cp), jnp.float32),
        in_specs=[vmem] * 9,
        out_specs=vmem,
        # Toy shapes fit in VMEM as a single block.  At scale: add a grid over
        # batch ("parallel"; splits across v7x's 2 TCs) and time ("arbitrary"),
        # give the weight/bias refs constant index_maps (lambda *_: (0, 0)) so
        # they stay VMEM-resident, and size gi tiles for v7x's 64 MiB VMEM via
        # pltpu.CompilerParams(vmem_limit_bytes=...).
    )
    out = fn(ids_flat, packed["emb"], packed["wih_all"], packed["gi_bias_all"],
             packed["whh_f"], packed["bhhn_f"], packed["bhhn_b"],
             packed["wfc"], packed["bfc"])
    return out[:B, :C]


# ------------------------- plain-JAX reference -------------------------------
def bigru_reference(input_ids, params):
    emb = params["embedding"]
    x = jnp.take(emb, input_ids, axis=0)  # (B, T, E)
    H = params["whh_f_t"].shape[0]
    B, T, _ = x.shape

    def cell(x_t, h, wih_t, whh_t, bih, bhh):
        gi = x_t @ wih_t + bih
        gh = h @ whh_t + bhh
        r = jax.nn.sigmoid(gi[:, :H] + gh[:, :H])
        z = jax.nn.sigmoid(gi[:, H:2 * H] + gh[:, H:2 * H])
        n = jnp.tanh(gi[:, 2 * H:] + r * gh[:, 2 * H:])
        return (1.0 - z) * n + z * h

    h = jnp.zeros((B, H), jnp.float32)
    for t in range(T):
        h = cell(x[:, t, :], h,
                 params["wih_f_t"], params["whh_f_t"],
                 params["bih_f"], params["bhh_f"])
    h_fwd = h
    h_bwd = cell(x[:, T - 1, :], jnp.zeros((B, H), jnp.float32),
                 params["wih_b_t"], params["whh_b_t"],
                 params["bih_b"], params["bhh_b"])
    gru_last = jnp.concatenate([h_fwd, h_bwd], axis=-1)
    return gru_last @ params["wfc_t"] + params["bfc"]


# ------------------------------ params --------------------------------------
def make_params(key, vocab_size, embedding_dim, hidden_dim, num_classes):
    ks = jax.random.split(key, 12)
    H, E, V, C = hidden_dim, embedding_dim, vocab_size, num_classes
    s = 1.0 / jnp.sqrt(jnp.float32(H))

    def u(k, shape):
        return jax.random.uniform(k, shape, jnp.float32, -s, s)

    return {
        "embedding": jax.random.normal(ks[0], (V, E), jnp.float32),
        # forward GRU (weights stored transposed for x @ W layout; gate order r,z,n)
        "wih_f_t": u(ks[1], (E, 3 * H)),
        "whh_f_t": u(ks[2], (H, 3 * H)),
        "bih_f": u(ks[3], (1, 3 * H)),
        "bhh_f": u(ks[4], (1, 3 * H)),
        # backward GRU
        "wih_b_t": u(ks[5], (E, 3 * H)),
        "whh_b_t": u(ks[6], (H, 3 * H)),
        "bih_b": u(ks[7], (1, 3 * H)),
        "bhh_b": u(ks[8], (1, 3 * H)),
        # classifier
        "wfc_t": u(ks[9], (2 * H, C)),
        "bfc": u(ks[10], (1, C)),
    }


# -------------------------------- main ---------------------------------------
if __name__ == "__main__":
    vocab_size, embedding_dim, hidden_dim, num_classes = 100, 32, 32, 10
    batch, seq_len = 2, 8

    key = jax.random.PRNGKey(0)
    k_params, k_ids = jax.random.split(key)
    params = make_params(k_params, vocab_size, embedding_dim, hidden_dim, num_classes)
    input_ids = jax.random.randint(k_ids, (batch, seq_len), 0, vocab_size, jnp.int32)

    packed = pack_params(params)
    logits = bigru_pallas(input_ids, params, packed)
    logits = jax.block_until_ready(logits)

    ref = bigru_reference(input_ids, params)
    assert logits.shape == (batch, num_classes)
    assert jnp.allclose(logits, ref, atol=1e-4, rtol=1e-4), "mismatch vs reference"

    print("KERNEL_OK")
</pallas_src>

<mosaic_0001>
module attributes {stable_mosaic.version = 11 : i64} {
  func.func @bigru_kernel(%arg0: memref<64x1xi32, #tpu.memory_space<vmem>>, %arg1: memref<128x32xf32, #tpu.memory_space<vmem>>, %arg2: memref<32x768xf32, #tpu.memory_space<vmem>>, %arg3: memref<1x768xf32, #tpu.memory_space<vmem>>, %arg4: memref<128x384xf32, #tpu.memory_space<vmem>>, %arg5: memref<1x128xf32, #tpu.memory_space<vmem>>, %arg6: memref<1x128xf32, #tpu.memory_space<vmem>>, %arg7: memref<256x128xf32, #tpu.memory_space<vmem>>, %arg8: memref<1x128xf32, #tpu.memory_space<vmem>>, %arg9: memref<8x128xf32, #tpu.memory_space<vmem>>) attributes {dimension_semantics = [], scalar_prefetch = 0 : i64, scratch_operands = 0 : i64, tpu.core_type = #tpu.core_type<tc>} {
    %c0 = arith.constant 0 : index
    %c0_0 = arith.constant 0 : index
    %0 = vector.load %arg0[%c0, %c0_0] : memref<64x1xi32, #tpu.memory_space<vmem>>, vector<64x1xi32>
    %1 = tpu.iota {dimensions = array<i32: 1>} : vector<64x128xi32>
    %2 = vector.broadcast %0 : vector<64x1xi32> to vector<64x128xi32>
    %3 = arith.cmpi eq, %2, %1 : vector<64x128xi32>
    %4 = arith.extui %3 : vector<64x128xi1> to vector<64x128xi32>
    %5 = arith.sitofp %4 : vector<64x128xi32> to vector<64x128xf32>
    %c0_1 = arith.constant 0 : index
    %c0_2 = arith.constant 0 : index
    %6 = vector.load %arg1[%c0_1, %c0_2] : memref<128x32xf32, #tpu.memory_space<vmem>>, vector<128x32xf32>
    %cst = arith.constant dense<0.000000e+00> : vector<64x32xf32>
    %7 = tpu.matmul %5, %6, %cst {dimension_numbers = #tpu.dot_dimension_numbers<[1], [0], [0], [1], [0, 0, 1, 1], [], []>} : vector<64x128xf32>, vector<128x32xf32>, vector<64x32xf32> -> vector<64x32xf32>
    %c0_3 = arith.constant 0 : index
    %c0_4 = arith.constant 0 : index
    %8 = vector.load %arg2[%c0_3, %c0_4] : memref<32x768xf32, #tpu.memory_space<vmem>>, vector<32x768xf32>
    %cst_5 = arith.constant dense<0.000000e+00> : vector<64x768xf32>
    %9 = tpu.matmul %7, %8, %cst_5 {dimension_numbers = #tpu.dot_dimension_numbers<[1], [0], [0], [1], [0, 0, 1, 1], [], []>} : vector<64x32xf32>, vector<32x768xf32>, vector<64x768xf32> -> vector<64x768xf32>
    %c0_6 = arith.constant 0 : index
    %c0_7 = arith.constant 0 : index
    %10 = vector.load %arg3[%c0_6, %c0_7] : memref<1x768xf32, #tpu.memory_space<vmem>>, vector<1x768xf32>
    %11 = vector.broadcast %10 : vector<1x768xf32> to vector<64x768xf32>
    %12 = arith.addf %9, %11 : vector<64x768xf32>
    %c0_8 = arith.constant 0 : index
    %c0_9 = arith.constant 0 : index
    %13 = vector.load %arg4[%c0_8, %c0_9] : memref<128x384xf32, #tpu.memory_space<vmem>>, vector<128x384xf32>
    %c0_10 = arith.constant 0 : index
    %c0_11 = arith.constant 0 : index
    %14 = vector.load %arg5[%c0_10, %c0_11] : memref<1x128xf32, #tpu.memory_space<vmem>>, vector<1x128xf32>
    %15 = vector.shape_cast %14 : vector<1x128xf32> to vector<1x128xf32>
    %16 = vector.broadcast %15 : vector<1x128xf32> to vector<8x128xf32>
    %c0_12 = arith.constant 0 : index
    %c0_13 = arith.constant 0 : index
    %17 = vector.load %arg6[%c0_12, %c0_13] : memref<1x128xf32, #tpu.memory_space<vmem>>, vector<1x128xf32>
    %18 = vector.shape_cast %17 : vector<1x128xf32> to vector<1x128xf32>
    %19 = vector.broadcast %18 : vector<1x128xf32> to vector<8x128xf32>
    %cst_14 = arith.constant 0.000000e+00 : f32
    %20 = vector.broadcast %cst_14 : f32 to vector<8x128xf32>
    %21 = vector.extract_strided_slice %12 {offsets = [0, 0], sizes = [8, 384], strides = [1, 1]} : vector<64x768xf32> to vector<8x384xf32>
    %cst_15 = arith.constant dense<0.000000e+00> : vector<8x384xf32>
    %22 = tpu.matmul %20, %13, %cst_15 {dimension_numbers = #tpu.dot_dimension_numbers<[1], [0], [0], [1], [0, 0, 1, 1], [], []>} : vector<8x128xf32>, vector<128x384xf32>, vector<8x384xf32> -> vector<8x384xf32>
    %23 = vector.extract_strided_slice %21 {offsets = [0, 0], sizes = [8, 128], strides = [1, 1]} : vector<8x384xf32> to vector<8x128xf32>
    %24 = vector.extract_strided_slice %22 {offsets = [0, 0], sizes = [8, 128], strides = [1, 1]} : vector<8x384xf32> to vector<8x128xf32>
    %25 = arith.addf %23, %24 : vector<8x128xf32>
    %26 = arith.negf %25 : vector<8x128xf32>
    %27 = math.exp %26 : vector<8x128xf32>
    %cst_16 = arith.constant 1.000000e+00 : f32
    %28 = vector.broadcast %cst_16 : f32 to vector<8x128xf32>
    %29 = arith.addf %28, %27 : vector<8x128xf32>
    %30 = arith.divf %28, %29 : vector<8x128xf32>
    %31 = vector.extract_strided_slice %21 {offsets = [0, 128], sizes = [8, 128], strides = [1, 1]} : vector<8x384xf32> to vector<8x128xf32>
    %32 = vector.extract_strided_slice %22 {offsets = [0, 128], sizes = [8, 128], strides = [1, 1]} : vector<8x384xf32> to vector<8x128xf32>
    %33 = arith.addf %31, %32 : vector<8x128xf32>
    %34 = arith.negf %33 : vector<8x128xf32>
    %35 = math.exp %34 : vector<8x128xf32>
    %cst_17 = arith.constant 1.000000e+00 : f32
    %36 = vector.broadcast %cst_17 : f32 to vector<8x128xf32>
    %37 = arith.addf %36, %35 : vector<8x128xf32>
    %38 = arith.divf %36, %37 : vector<8x128xf32>
    %39 = vector.extract_strided_slice %21 {offsets = [0, 256], sizes = [8, 128], strides = [1, 1]} : vector<8x384xf32> to vector<8x128xf32>
    %40 = vector.extract_strided_slice %22 {offsets = [0, 256], sizes = [8, 128], strides = [1, 1]} : vector<8x384xf32> to vector<8x128xf32>
    %41 = arith.addf %40, %16 : vector<8x128xf32>
    %42 = arith.mulf %30, %41 : vector<8x128xf32>
    %43 = arith.addf %39, %42 : vector<8x128xf32>
    %44 = math.tanh %43 : vector<8x128xf32>
    %cst_18 = arith.constant 1.000000e+00 : f32
    %45 = vector.broadcast %cst_18 : f32 to vector<8x128xf32>
    %46 = arith.subf %45, %38 : vector<8x128xf32>
    %47 = arith.mulf %46, %44 : vector<8x128xf32>
    %48 = arith.mulf %38, %20 : vector<8x128xf32>
    %49 = arith.addf %47, %48 : vector<8x128xf32>
    %50 = vector.extract_strided_slice %12 {offsets = [8, 0], sizes = [8, 384], strides = [1, 1]} : vector<64x768xf32> to vector<8x384xf32>
    %cst_19 = arith.constant dense<0.000000e+00> : vector<8x384xf32>
    %51 = tpu.matmul %49, %13, %cst_19 {dimension_numbers = #tpu.dot_dimension_numbers<[1], [0], [0], [1], [0, 0, 1, 1], [], []>} : vector<8x128xf32>, vector<128x384xf32>, vector<8x384xf32> -> vector<8x384xf32>
    %52 = vector.extract_strided_slice %50 {offsets = [0, 0], sizes = [8, 128], strides = [1, 1]} : vector<8x384xf32> to vector<8x128xf32>
    %53 = vector.extract_strided_slice %51 {offsets = [0, 0], sizes = [8, 128], strides = [1, 1]} : vector<8x384xf32> to vector<8x128xf32>
    %54 = arith.addf %52, %53 : vector<8x128xf32>
    %55 = arith.negf %54 : vector<8x128xf32>
    %56 = math.exp %55 : vector<8x128xf32>
    %cst_20 = arith.constant 1.000000e+00 : f32
    %57 = vector.broadcast %cst_20 : f32 to vector<8x128xf32>
    %58 = arith.addf %57, %56 : vector<8x128xf32>
    %59 = arith.divf %57, %58 : vector<8x128xf32>
    %60 = vector.extract_strided_slice %50 {offsets = [0, 128], sizes = [8, 128], strides = [1, 1]} : vector<8x384xf32> to vector<8x128xf32>
    %61 = vector.extract_strided_slice %51 {offsets = [0, 128], sizes = [8, 128], strides = [1, 1]} : vector<8x384xf32> to vector<8x128xf32>
    %62 = arith.addf %60, %61 : vector<8x128xf32>
    %63 = arith.negf %62 : vector<8x128xf32>
    %64 = math.exp %63 : vector<8x128xf32>
    %cst_21 = arith.constant 1.000000e+00 : f32
    %65 = vector.broadcast %cst_21 : f32 to vector<8x128xf32>
    %66 = arith.addf %65, %64 : vector<8x128xf32>
    %67 = arith.divf %65, %66 : vector<8x128xf32>
    %68 = vector.extract_strided_slice %50 {offsets = [0, 256], sizes = [8, 128], strides = [1, 1]} : vector<8x384xf32> to vector<8x128xf32>
    %69 = vector.extract_strided_slice %51 {offsets = [0, 256], sizes = [8, 128], strides = [1, 1]} : vector<8x384xf32> to vector<8x128xf32>
    %70 = arith.addf %69, %16 : vector<8x128xf32>
    %71 = arith.mulf %59, %70 : vector<8x128xf32>
    %72 = arith.addf %68, %71 : vector<8x128xf32>
    %73 = math.tanh %72 : vector<8x128xf32>
    %cst_22 = arith.constant 1.000000e+00 : f32
    %74 = vector.broadcast %cst_22 : f32 to vector<8x128xf32>
    %75 = arith.subf %74, %67 : vector<8x128xf32>
    %76 = arith.mulf %75, %73 : vector<8x128xf32>
    %77 = arith.mulf %67, %49 : vector<8x128xf32>
    %78 = arith.addf %76, %77 : vector<8x128xf32>
    %79 = vector.extract_strided_slice %12 {offsets = [16, 0], sizes = [8, 384], strides = [1, 1]} : vector<64x768xf32> to vector<8x384xf32>
    %cst_23 = arith.constant dense<0.000000e+00> : vector<8x384xf32>
    %80 = tpu.matmul %78, %13, %cst_23 {dimension_numbers = #tpu.dot_dimension_numbers<[1], [0], [0], [1], [0, 0, 1, 1], [], []>} : vector<8x128xf32>, vector<128x384xf32>, vector<8x384xf32> -> vector<8x384xf32>
    %81 = vector.extract_strided_slice %79 {offsets = [0, 0], sizes = [8, 128], strides = [1, 1]} : vector<8x384xf32> to vector<8x128xf32>
    %82 = vector.extract_strided_slice %80 {offsets = [0, 0], sizes = [8, 128], strides = [1, 1]} : vector<8x384xf32> to vector<8x128xf32>
    %83 = arith.addf %81, %82 : vector<8x128xf32>
    %84 = arith.negf %83 : vector<8x128xf32>
    %85 = math.exp %84 : vector<8x128xf32>
    %cst_24 = arith.constant 1.000000e+00 : f32
    %86 = vector.broadcast %cst_24 : f32 to vector<8x128xf32>
    %87 = arith.addf %86, %85 : vector<8x128xf32>
    %88 = arith.divf %86, %87 : vector<8x128xf32>
    %89 = vector.extract_strided_slice %79 {offsets = [0, 128], sizes = [8, 128], strides = [1, 1]} : vector<8x384xf32> to vector<8x128xf32>
    %90 = vector.extract_strided_slice %80 {offsets = [0, 128], sizes = [8, 128], strides = [1, 1]} : vector<8x384xf32> to vector<8x128xf32>
    %91 = arith.addf %89, %90 : vector<8x128xf32>
    %92 = arith.negf %91 : vector<8x128xf32>
    %93 = math.exp %92 : vector<8x128xf32>
    %cst_25 = arith.constant 1.000000e+00 : f32
    %94 = vector.broadcast %cst_25 : f32 to vector<8x128xf32>
    %95 = arith.addf %94, %93 : vector<8x128xf32>
    %96 = arith.divf %94, %95 : vector<8x128xf32>
    %97 = vector.extract_strided_slice %79 {offsets = [0, 256], sizes = [8, 128], strides = [1, 1]} : vector<8x384xf32> to vector<8x128xf32>
    %98 = vector.extract_strided_slice %80 {offsets = [0, 256], sizes = [8, 128], strides = [1, 1]} : vector<8x384xf32> to vector<8x128xf32>
    %99 = arith.addf %98, %16 : vector<8x128xf32>
    %100 = arith.mulf %88, %99 : vector<8x128xf32>
    %101 = arith.addf %97, %100 : vector<8x128xf32>
    %102 = math.tanh %101 : vector<8x128xf32>
    %cst_26 = arith.constant 1.000000e+00 : f32
    %103 = vector.broadcast %cst_26 : f32 to vector<8x128xf32>
    %104 = arith.subf %103, %96 : vector<8x128xf32>
    %105 = arith.mulf %104, %102 : vector<8x128xf32>
    %106 = arith.mulf %96, %78 : vector<8x128xf32>
    %107 = arith.addf %105, %106 : vector<8x128xf32>
    %108 = vector.extract_strided_slice %12 {offsets = [24, 0], sizes = [8, 384], strides = [1, 1]} : vector<64x768xf32> to vector<8x384xf32>
    %cst_27 = arith.constant dense<0.000000e+00> : vector<8x384xf32>
    %109 = tpu.matmul %107, %13, %cst_27 {dimension_numbers = #tpu.dot_dimension_numbers<[1], [0], [0], [1], [0, 0, 1, 1], [], []>} : vector<8x128xf32>, vector<128x384xf32>, vector<8x384xf32> -> vector<8x384xf32>
    %110 = vector.extract_strided_slice %108 {offsets = [0, 0], sizes = [8, 128], strides = [1, 1]} : vector<8x384xf32> to vector<8x128xf32>
    %111 = vector.extract_strided_slice %109 {offsets = [0, 0], sizes = [8, 128], strides = [1, 1]} : vector<8x384xf32> to vector<8x128xf32>
    %112 = arith.addf %110, %111 : vector<8x128xf32>
    %113 = arith.negf %112 : vector<8x128xf32>
    %114 = math.exp %113 : vector<8x128xf32>
    %cst_28 = arith.constant 1.000000e+00 : f32
    %115 = vector.broadcast %cst_28 : f32 to vector<8x128xf32>
    %116 = arith.addf %115, %114 : vector<8x128xf32>
    %117 = arith.divf %115, %116 : vector<8x128xf32>
    %118 = vector.extract_strided_slice %108 {offsets = [0, 128], sizes = [8, 128], strides = [1, 1]} : vector<8x384xf32> to vector<8x128xf32>
    %119 = vector.extract_strided_slice %109 {offsets = [0, 128], sizes = [8, 128], strides = [1, 1]} : vector<8x384xf32> to vector<8x128xf32>
    %120 = arith.addf %118, %119 : vector<8x128xf32>
    %121 = arith.negf %120 : vector<8x128xf32>
    %122 = math.exp %121 : vector<8x128xf32>
    %cst_29 = arith.constant 1.000000e+00 : f32
    %123 = vector.broadcast %cst_29 : f32 to vector<8x128xf32>
    %124 = arith.addf %123, %122 : vector<8x128xf32>
    %125 = arith.divf %123, %124 : vector<8x128xf32>
    %126 = vector.extract_strided_slice %108 {offsets = [0, 256], sizes = [8, 128], strides = [1, 1]} : vector<8x384xf32> to vector<8x128xf32>
    %127 = vector.extract_strided_slice %109 {offsets = [0, 256], sizes = [8, 128], strides = [1, 1]} : vector<8x384xf32> to vector<8x128xf32>
    %128 = arith.addf %127, %16 : vector<8x128xf32>
    %129 = arith.mulf %117, %128 : vector<8x128xf32>
    %130 = arith.addf %126, %129 : vector<8x128xf32>
    %131 = math.tanh %130 : vector<8x128xf32>
    %cst_30 = arith.constant 1.000000e+00 : f32
    %132 = vector.broadcast %cst_30 : f32 to vector<8x128xf32>
    %133 = arith.subf %132, %125 : vector<8x128xf32>
    %134 = arith.mulf %133, %131 : vector<8x128xf32>
    %135 = arith.mulf %125, %107 : vector<8x128xf32>
    %136 = arith.addf %134, %135 : vector<8x128xf32>
    %137 = vector.extract_strided_slice %12 {offsets = [32, 0], sizes = [8, 384], strides = [1, 1]} : vector<64x768xf32> to vector<8x384xf32>
    %cst_31 = arith.constant dense<0.000000e+00> : vector<8x384xf32>
    %138 = tpu.matmul %136, %13, %cst_31 {dimension_numbers = #tpu.dot_dimension_numbers<[1], [0], [0], [1], [0, 0, 1, 1], [], []>} : vector<8x128xf32>, vector<128x384xf32>, vector<8x384xf32> -> vector<8x384xf32>
    %139 = vector.extract_strided_slice %137 {offsets = [0, 0], sizes = [8, 128], strides = [1, 1]} : vector<8x384xf32> to vector<8x128xf32>
    %140 = vector.extract_strided_slice %138 {offsets = [0, 0], sizes = [8, 128], strides = [1, 1]} : vector<8x384xf32> to vector<8x128xf32>
    %141 = arith.addf %139, %140 : vector<8x128xf32>
    %142 = arith.negf %141 : vector<8x128xf32>
    %143 = math.exp %142 : vector<8x128xf32>
    %cst_32 = arith.constant 1.000000e+00 : f32
    %144 = vector.broadcast %cst_32 : f32 to vector<8x128xf32>
    %145 = arith.addf %144, %143 : vector<8x128xf32>
    %146 = arith.divf %144, %145 : vector<8x128xf32>
    %147 = vector.extract_strided_slice %137 {offsets = [0, 128], sizes = [8, 128], strides = [1, 1]} : vector<8x384xf32> to vector<8x128xf32>
    %148 = vector.extract_strided_slice %138 {offsets = [0, 128], sizes = [8, 128], strides = [1, 1]} : vector<8x384xf32> to vector<8x128xf32>
    %149 = arith.addf %147, %148 : vector<8x128xf32>
    %150 = arith.negf %149 : vector<8x128xf32>
    %151 = math.exp %150 : vector<8x128xf32>
    %cst_33 = arith.constant 1.000000e+00 : f32
    %152 = vector.broadcast %cst_33 : f32 to vector<8x128xf32>
    %153 = arith.addf %152, %151 : vector<8x128xf32>
    %154 = arith.divf %152, %153 : vector<8x128xf32>
    %155 = vector.extract_strided_slice %137 {offsets = [0, 256], sizes = [8, 128], strides = [1, 1]} : vector<8x384xf32> to vector<8x128xf32>
    %156 = vector.extract_strided_slice %138 {offsets = [0, 256], sizes = [8, 128], strides = [1, 1]} : vector<8x384xf32> to vector<8x128xf32>
    %157 = arith.addf %156, %16 : vector<8x128xf32>
    %158 = arith.mulf %146, %157 : vector<8x128xf32>
    %159 = arith.addf %155, %158 : vector<8x128xf32>
    %160 = math.tanh %159 : vector<8x128xf32>
    %cst_34 = arith.constant 1.000000e+00 : f32
    %161 = vector.broadcast %cst_34 : f32 to vector<8x128xf32>
    %162 = arith.subf %161, %154 : vector<8x128xf32>
    %163 = arith.mulf %162, %160 : vector<8x128xf32>
    %164 = arith.mulf %154, %136 : vector<8x128xf32>
    %165 = arith.addf %163, %164 : vector<8x128xf32>
    %166 = vector.extract_strided_slice %12 {offsets = [40, 0], sizes = [8, 384], strides = [1, 1]} : vector<64x768xf32> to vector<8x384xf32>
    %cst_35 = arith.constant dense<0.000000e+00> : vector<8x384xf32>
    %167 = tpu.matmul %165, %13, %cst_35 {dimension_numbers = #tpu.dot_dimension_numbers<[1], [0], [0], [1], [0, 0, 1, 1], [], []>} : vector<8x128xf32>, vector<128x384xf32>, vector<8x384xf32> -> vector<8x384xf32>
    %168 = vector.extract_strided_slice %166 {offsets = [0, 0], sizes = [8, 128], strides = [1, 1]} : vector<8x384xf32> to vector<8x128xf32>
    %169 = vector.extract_strided_slice %167 {offsets = [0, 0], sizes = [8, 128], strides = [1, 1]} : vector<8x384xf32> to vector<8x128xf32>
    %170 = arith.addf %168, %169 : vector<8x128xf32>
    %171 = arith.negf %170 : vector<8x128xf32>
    %172 = math.exp %171 : vector<8x128xf32>
    %cst_36 = arith.constant 1.000000e+00 : f32
    %173 = vector.broadcast %cst_36 : f32 to vector<8x128xf32>
    %174 = arith.addf %173, %172 : vector<8x128xf32>
    %175 = arith.divf %173, %174 : vector<8x128xf32>
    %176 = vector.extract_strided_slice %166 {offsets = [0, 128], sizes = [8, 128], strides = [1, 1]} : vector<8x384xf32> to vector<8x128xf32>
    %177 = vector.extract_strided_slice %167 {offsets = [0, 128], sizes = [8, 128], strides = [1, 1]} : vector<8x384xf32> to vector<8x128xf32>
    %178 = arith.addf %176, %177 : vector<8x128xf32>
    %179 = arith.negf %178 : vector<8x128xf32>
    %180 = math.exp %179 : vector<8x128xf32>
    %cst_37 = arith.constant 1.000000e+00 : f32
    %181 = vector.broadcast %cst_37 : f32 to vector<8x128xf32>
    %182 = arith.addf %181, %180 : vector<8x128xf32>
    %183 = arith.divf %181, %182 : vector<8x128xf32>
    %184 = vector.extract_strided_slice %166 {offsets = [0, 256], sizes = [8, 128], strides = [1, 1]} : vector<8x384xf32> to vector<8x128xf32>
    %185 = vector.extract_strided_slice %167 {offsets = [0, 256], sizes = [8, 128], strides = [1, 1]} : vector<8x384xf32> to vector<8x128xf32>
    %186 = arith.addf %185, %16 : vector<8x128xf32>
    %187 = arith.mulf %175, %186 : vector<8x128xf32>
    %188 = arith.addf %184, %187 : vector<8x128xf32>
    %189 = math.tanh %188 : vector<8x128xf32>
    %cst_38 = arith.constant 1.000000e+00 : f32
    %190 = vector.broadcast %cst_38 : f32 to vector<8x128xf32>
    %191 = arith.subf %190, %183 : vector<8x128xf32>
    %192 = arith.mulf %191, %189 : vector<8x128xf32>
    %193 = arith.mulf %183, %165 : vector<8x128xf32>
    %194 = arith.addf %192, %193 : vector<8x128xf32>
    %195 = vector.extract_strided_slice %12 {offsets = [48, 0], sizes = [8, 384], strides = [1, 1]} : vector<64x768xf32> to vector<8x384xf32>
    %cst_39 = arith.constant dense<0.000000e+00> : vector<8x384xf32>
    %196 = tpu.matmul %194, %13, %cst_39 {dimension_numbers = #tpu.dot_dimension_numbers<[1], [0], [0], [1], [0, 0, 1, 1], [], []>} : vector<8x128xf32>, vector<128x384xf32>, vector<8x384xf32> -> vector<8x384xf32>
    %197 = vector.extract_strided_slice %195 {offsets = [0, 0], sizes = [8, 128], strides = [1, 1]} : vector<8x384xf32> to vector<8x128xf32>
    %198 = vector.extract_strided_slice %196 {offsets = [0, 0], sizes = [8, 128], strides = [1, 1]} : vector<8x384xf32> to vector<8x128xf32>
    %199 = arith.addf %197, %198 : vector<8x128xf32>
    %200 = arith.negf %199 : vector<8x128xf32>
    %201 = math.exp %200 : vector<8x128xf32>
    %cst_40 = arith.constant 1.000000e+00 : f32
    %202 = vector.broadcast %cst_40 : f32 to vector<8x128xf32>
    %203 = arith.addf %202, %201 : vector<8x128xf32>
    %204 = arith.divf %202, %203 : vector<8x128xf32>
    %205 = vector.extract_strided_slice %195 {offsets = [0, 128], sizes = [8, 128], strides = [1, 1]} : vector<8x384xf32> to vector<8x128xf32>
    %206 = vector.extract_strided_slice %196 {offsets = [0, 128], sizes = [8, 128], strides = [1, 1]} : vector<8x384xf32> to vector<8x128xf32>
    %207 = arith.addf %205, %206 : vector<8x128xf32>
    %208 = arith.negf %207 : vector<8x128xf32>
    %209 = math.exp %208 : vector<8x128xf32>
    %cst_41 = arith.constant 1.000000e+00 : f32
    %210 = vector.broadcast %cst_41 : f32 to vector<8x128xf32>
    %211 = arith.addf %210, %209 : vector<8x128xf32>
    %212 = arith.divf %210, %211 : vector<8x128xf32>
    %213 = vector.extract_strided_slice %195 {offsets = [0, 256], sizes = [8, 128], strides = [1, 1]} : vector<8x384xf32> to vector<8x128xf32>
    %214 = vector.extract_strided_slice %196 {offsets = [0, 256], sizes = [8, 128], strides = [1, 1]} : vector<8x384xf32> to vector<8x128xf32>
    %215 = arith.addf %214, %16 : vector<8x128xf32>
    %216 = arith.mulf %204, %215 : vector<8x128xf32>
    %217 = arith.addf %213, %216 : vector<8x128xf32>
    %218 = math.tanh %217 : vector<8x128xf32>
    %cst_42 = arith.constant 1.000000e+00 : f32
    %219 = vector.broadcast %cst_42 : f32 to vector<8x128xf32>
    %220 = arith.subf %219, %212 : vector<8x128xf32>
    %221 = arith.mulf %220, %218 : vector<8x128xf32>
    %222 = arith.mulf %212, %194 : vector<8x128xf32>
    %223 = arith.addf %221, %222 : vector<8x128xf32>
    %224 = vector.extract_strided_slice %12 {offsets = [56, 0], sizes = [8, 384], strides = [1, 1]} : vector<64x768xf32> to vector<8x384xf32>
    %cst_43 = arith.constant dense<0.000000e+00> : vector<8x384xf32>
    %225 = tpu.matmul %223, %13, %cst_43 {dimension_numbers = #tpu.dot_dimension_numbers<[1], [0], [0], [1], [0, 0, 1, 1], [], []>} : vector<8x128xf32>, vector<128x384xf32>, vector<8x384xf32> -> vector<8x384xf32>
    %226 = vector.extract_strided_slice %224 {offsets = [0, 0], sizes = [8, 128], strides = [1, 1]} : vector<8x384xf32> to vector<8x128xf32>
    %227 = vector.extract_strided_slice %225 {offsets = [0, 0], sizes = [8, 128], strides = [1, 1]} : vector<8x384xf32> to vector<8x128xf32>
    %228 = arith.addf %226, %227 : vector<8x128xf32>
    %229 = arith.negf %228 : vector<8x128xf32>
    %230 = math.exp %229 : vector<8x128xf32>
    %cst_44 = arith.constant 1.000000e+00 : f32
    %231 = vector.broadcast %cst_44 : f32 to vector<8x128xf32>
    %232 = arith.addf %231, %230 : vector<8x128xf32>
    %233 = arith.divf %231, %232 : vector<8x128xf32>
    %234 = vector.extract_strided_slice %224 {offsets = [0, 128], sizes = [8, 128], strides = [1, 1]} : vector<8x384xf32> to vector<8x128xf32>
    %235 = vector.extract_strided_slice %225 {offsets = [0, 128], sizes = [8, 128], strides = [1, 1]} : vector<8x384xf32> to vector<8x128xf32>
    %236 = arith.addf %234, %235 : vector<8x128xf32>
    %237 = arith.negf %236 : vector<8x128xf32>
    %238 = math.exp %237 : vector<8x128xf32>
    %cst_45 = arith.constant 1.000000e+00 : f32
    %239 = vector.broadcast %cst_45 : f32 to vector<8x128xf32>
    %240 = arith.addf %239, %238 : vector<8x128xf32>
    %241 = arith.divf %239, %240 : vector<8x128xf32>
    %242 = vector.extract_strided_slice %224 {offsets = [0, 256], sizes = [8, 128], strides = [1, 1]} : vector<8x384xf32> to vector<8x128xf32>
    %243 = vector.extract_strided_slice %225 {offsets = [0, 256], sizes = [8, 128], strides = [1, 1]} : vector<8x384xf32> to vector<8x128xf32>
    %244 = arith.addf %243, %16 : vector<8x128xf32>
    %245 = arith.mulf %233, %244 : vector<8x128xf32>
    %246 = arith.addf %242, %245 : vector<8x128xf32>
    %247 = math.tanh %246 : vector<8x128xf32>
    %cst_46 = arith.constant 1.000000e+00 : f32
    %248 = vector.broadcast %cst_46 : f32 to vector<8x128xf32>
    %249 = arith.subf %248, %241 : vector<8x128xf32>
    %250 = arith.mulf %249, %247 : vector<8x128xf32>
    %251 = arith.mulf %241, %223 : vector<8x128xf32>
    %252 = arith.addf %250, %251 : vector<8x128xf32>
    %253 = vector.extract_strided_slice %12 {offsets = [56, 384], sizes = [8, 384], strides = [1, 1]} : vector<64x768xf32> to vector<8x384xf32>
    %254 = vector.extract_strided_slice %253 {offsets = [0, 0], sizes = [8, 128], strides = [1, 1]} : vector<8x384xf32> to vector<8x128xf32>
    %255 = arith.negf %254 : vector<8x128xf32>
    %256 = math.exp %255 : vector<8x128xf32>
    %cst_47 = arith.constant 1.000000e+00 : f32
    %257 = vector.broadcast %cst_47 : f32 to vector<8x128xf32>
    %258 = arith.addf %257, %256 : vector<8x128xf32>
    %259 = arith.divf %257, %258 : vector<8x128xf32>
    %260 = vector.extract_strided_slice %253 {offsets = [0, 128], sizes = [8, 128], strides = [1, 1]} : vector<8x384xf32> to vector<8x128xf32>
    %261 = arith.negf %260 : vector<8x128xf32>
    %262 = math.exp %261 : vector<8x128xf32>
    %cst_48 = arith.constant 1.000000e+00 : f32
    %263 = vector.broadcast %cst_48 : f32 to vector<8x128xf32>
    %264 = arith.addf %263, %262 : vector<8x128xf32>
    %265 = arith.divf %263, %264 : vector<8x128xf32>
    %266 = vector.extract_strided_slice %253 {offsets = [0, 256], sizes = [8, 128], strides = [1, 1]} : vector<8x384xf32> to vector<8x128xf32>
    %267 = arith.mulf %259, %19 : vector<8x128xf32>
    %268 = arith.addf %266, %267 : vector<8x128xf32>
    %269 = math.tanh %268 : vector<8x128xf32>
    %cst_49 = arith.constant 1.000000e+00 : f32
    %270 = vector.broadcast %cst_49 : f32 to vector<8x128xf32>
    %271 = arith.subf %270, %265 : vector<8x128xf32>
    %272 = arith.mulf %271, %269 : vector<8x128xf32>
    %273 = tpu.concatenate %252, %272 in 1 : vector<8x128xf32>, vector<8x128xf32> -> vector<8x256xf32>
    %c0_50 = arith.constant 0 : index
    %c0_51 = arith.constant 0 : index
    %274 = vector.load %arg7[%c0_50, %c0_51] : memref<256x128xf32, #tpu.memory_space<vmem>>, vector<256x128xf32>
    %cst_52 = arith.constant dense<0.000000e+00> : vector<8x128xf32>
    %275 = tpu.matmul %273, %274, %cst_52 {dimension_numbers = #tpu.dot_dimension_numbers<[1], [0], [0], [1], [0, 0, 1, 1], [], []>} : vector<8x256xf32>, vector<256x128xf32>, vector<8x128xf32> -> vector<8x128xf32>
    %c0_53 = arith.constant 0 : index
    %c0_54 = arith.constant 0 : index
    %276 = vector.load %arg8[%c0_53, %c0_54] : memref<1x128xf32, #tpu.memory_space<vmem>>, vector<1x128xf32>
    %277 = vector.broadcast %276 : vector<1x128xf32> to vector<8x128xf32>
    %278 = arith.addf %275, %277 : vector<8x128xf32>
    %c0_55 = arith.constant 0 : index
    %c0_56 = arith.constant 0 : index
    %279 = vector.load %arg9[%c0_55, %c0_56] : memref<8x128xf32, #tpu.memory_space<vmem>>, vector<8x128xf32>
    tpu.vector_store %arg9[%c0_55, %c0_56], %278 {strides = array<i32>} : memref<8x128xf32, #tpu.memory_space<vmem>>, vector<8x128xf32>,
    return
  }
}

</mosaic_0001>

<llo_original>
// kernel: tpu_custom_call.1
$region0: #{tpu_custom_call.1}
  #allocation0 [shape = 'u32[]', space=smem, size = 0x4, offset = 0x4, fixed_abs, tag = 'smem constant byte address 0x4 - core index']
  #allocation1 [shape = 'u32[144,128]{1,0:T(1,128)}', space=vmem, size = 0x12000, scoped, tag = 'internal scratch']
  %s0 = inlined_call_operand.vmem [shape: s32[64,1], index: 0, kind: input, shape index: {}]
  %s1 = inlined_call_operand.vmem [shape: f32[128,32], index: 1, kind: input, shape index: {}]
  %s2 = inlined_call_operand.vmem [shape: f32[32,768], index: 2, kind: input, shape index: {}]
  %s3 = inlined_call_operand.vmem [shape: f32[1,768], index: 3, kind: input, shape index: {}]
  %s4 = inlined_call_operand.hbm [shape: f32[128,384], index: 4, kind: input, shape index: {}]
  %s5 = inlined_call_operand.vmem [shape: f32[1,128], index: 5, kind: input, shape index: {}]
  %s6 = inlined_call_operand.vmem [shape: f32[1,128], index: 6, kind: input, shape index: {}]
  %s7 = inlined_call_operand.hbm [shape: f32[256,128], index: 7, kind: input, shape index: {}]
  %s8 = inlined_call_operand.vmem [shape: f32[1,128], index: 8, kind: input, shape index: {}]
  %s9 = inlined_call_operand.hbm [shape: f32[8,128], index: 9, kind: output, shape index: {}]
  %s10 = sld [smem:[#allocation0]]
  $region54: #{tpu_custom_call.1} parent=0
    _
  %s12 = ssub.s32 1, %s10
  %s13 = scalar_select 0, %s12, %s10
  $region1: #{tpu_custom_call.1} parent=0
    #allocation2 [shape = 'u8[196608]{0}', space=vmem, size = 0x30000, scoped, tag = 'input window, operand 4, single buffered']
    #allocation3 [shape = 's32[1]{0}', space=sflag, size = 0x4, scoped, tag = 'scoped memory for tpu_custom_call.1']
    #allocation4 [shape = 's32[1]{0}', space=sflag, size = 0x4, scoped, tag = 'scoped memory for tpu_custom_call.1']
    #allocation5 [shape = 'u8[131072]{0}', space=vmem, size = 0x20000, scoped, tag = 'input window, operand 7, single buffered']
    #allocation6 [shape = 's32[1]{0}', space=sflag, size = 0x4, scoped, tag = 'scoped memory for tpu_custom_call.1']
    #allocation7 [shape = 'u8[4096]{0}', space=vmem, size = 0x1000, scoped, tag = 'output window, operand 0, single buffered']
    %14 = vsyncpa [#allocation3], 0
    %15 = vsyncpa [#allocation6], 0
    %16 = vsyncpa [#allocation4], 0
    // Predicated region
    $region2: #{tpu_custom_call.1} parent=1 // pred_check
      _
    $region3: #{tpu_custom_call.1} parent=1 // pred_check_branch
      %18 = sbr.rel (0) target = $region5
    $region4: #{tpu_custom_call.1} parent=1 // pred_region
      _
    $region5: #{tpu_custom_call.1} parent=1 // pred_fallthru
      _
    // Predicated region
    $region6: #{tpu_custom_call.1} parent=1 // pred_check
      _
    $region7: #{tpu_custom_call.1} parent=1 // pred_check_branch
      %20 = sbr.rel (0) target = $region9
    $region8: #{tpu_custom_call.1} parent=1 // pred_region
      _
    $region9: #{tpu_custom_call.1} parent=1 // pred_fallthru
      _
    // Predicated region
    $region10: #{tpu_custom_call.1} parent=1 // pred_check
      _
    $region11: #{tpu_custom_call.1} parent=1 // pred_check_branch
      %22 = sbr.rel (0) target = $region13
    $region12: #{tpu_custom_call.1} parent=1 // pred_region
      _
    $region13: #{tpu_custom_call.1} parent=1 // pred_fallthru
      _
    // Predicated region
    $region14: #{tpu_custom_call.1} parent=1 // pred_check
      _
    $region15: #{tpu_custom_call.1} parent=1 // pred_check_branch
      %24 = sbr.rel (0) target = $region17
    $region16: #{tpu_custom_call.1} parent=1 // pred_region
      _
    $region17: #{tpu_custom_call.1} parent=1 // pred_fallthru
      _
    // Predicated region
    $region18: #{tpu_custom_call.1} parent=1 // pred_check
      _
    $region19: #{tpu_custom_call.1} parent=1 // pred_check_branch
      %26 = sbr.rel (0) target = $region21
    $region20: #{tpu_custom_call.1} parent=1 // pred_region
      %s28 = ssub.s32 6144, 6144
      %29 = vsyncadd [#allocation3], %s28
      %s30 = sshll.u32 [#allocation2], 4
      %s31 = int_to_ptr.vmem [resolvable:$true] %s30
      %36 = dma.hbm_to_vmem [thread:$0]  %s4, 6144, %s31, [#allocation3], 384, 384, 24
    $region21: #{tpu_custom_call.1} parent=1 // pred_fallthru
      _
    // Predicated region
    $region22: #{tpu_custom_call.1} parent=1 // pred_check
      _
    $region23: #{tpu_custom_call.1} parent=1 // pred_check_branch
      %38 = sbr.rel (0) target = $region25
    $region24: #{tpu_custom_call.1} parent=1 // pred_region
      _
    $region25: #{tpu_custom_call.1} parent=1 // pred_fallthru
      _
    // Predicated region
    $region26: #{tpu_custom_call.1} parent=1 // pred_check
      _
    $region27: #{tpu_custom_call.1} parent=1 // pred_check_branch
      %40 = sbr.rel (0) target = $region29
    $region28: #{tpu_custom_call.1} parent=1 // pred_region
      _
    $region29: #{tpu_custom_call.1} parent=1 // pred_fallthru
      _
    // Predicated region
    $region30: #{tpu_custom_call.1} parent=1 // pred_check
      _
    $region31: #{tpu_custom_call.1} parent=1 // pred_check_branch
      %42 = sbr.rel (0) target = $region33
    $region32: #{tpu_custom_call.1} parent=1 // pred_region
      %s44 = ssub.s32 4096, 4096
      %45 = vsyncadd [#allocation6], %s44
      %s46 = sshll.u32 [#allocation5], 4
      %s47 = int_to_ptr.vmem [resolvable:$true] %s46
      %52 = dma.hbm_to_vmem [thread:$0]  %s7, 4096, %s47, [#allocation6], 128, 128, 8
    $region33: #{tpu_custom_call.1} parent=1 // pred_fallthru
      _
    // Predicated region
    $region34: #{tpu_custom_call.1} parent=1 // pred_check
      _
    $region35: #{tpu_custom_call.1} parent=1 // pred_check_branch
      %54 = sbr.rel (0) target = $region37
    $region36: #{tpu_custom_call.1} parent=1 // pred_region
      _
    $region37: #{tpu_custom_call.1} parent=1 // pred_fallthru
      _
    // Predicated region
    $region38: #{tpu_custom_call.1} parent=1 // pred_check
      _
    $region39: #{tpu_custom_call.1} parent=1 // pred_check_branch
      %56 = sbr.rel (0) target = $region41
    $region40: #{tpu_custom_call.1} parent=1 // pred_region
      %57 = dma.done [#allocation3], 6144
    $region41: #{tpu_custom_call.1} parent=1 // pred_fallthru
      _
    // Predicated region
    $region42: #{tpu_custom_call.1} parent=1 // pred_check
      _
    $region43: #{tpu_custom_call.1} parent=1 // pred_check_branch
      %59 = sbr.rel (0) target = $region45
    $region44: #{tpu_custom_call.1} parent=1 // pred_region
      %60 = dma.done [#allocation6], 4096
    $region45: #{tpu_custom_call.1} parent=1 // pred_fallthru
      _
    %v61 = vld [vmem:[%s0] sm:$0xff]
    %v62 = vld [vmem:[%s0 + $0x8] sm:$0xff]
    %v63 = vld [vmem:[%s0 + $0x10] sm:$0xff]
    %v64 = vld [vmem:[%s0 + $0x18] sm:$0xff]
    %v65 = vld [vmem:[%s0 + $0x20] sm:$0xff]
    %v66 = vld [vmem:[%s0 + $0x28] sm:$0xff]
    %v67 = vld [vmem:[%s0 + $0x30] sm:$0xff]
    %v68 = vld [vmem:[%s0 + $0x38] sm:$0xff]
    %v69 = vlaneseq
    %v70 = vand.u32 %v69, 127
    %71 = vset.pattern.permute.xlu0 0
    %72 = vperm.xlu0 %71, %v61
    %v73 = vpop.permute.xlu0 %72
    %74 = vset.pattern.permute.xlu0 0
    %75 = vperm.xlu0 %74, %v62
    %v76 = vpop.permute.xlu0 %75
    %77 = vset.pattern.permute.xlu0 0
    %78 = vperm.xlu0 %77, %v63
    %v79 = vpop.permute.xlu0 %78
    %80 = vset.pattern.permute.xlu0 0
    %81 = vperm.xlu0 %80, %v64
    %v82 = vpop.permute.xlu0 %81
    %83 = vset.pattern.permute.xlu0 0
    %84 = vperm.xlu0 %83, %v65
    %v85 = vpop.permute.xlu0 %84
    %86 = vset.pattern.permute.xlu0 0
    %87 = vperm.xlu0 %86, %v66
    %v88 = vpop.permute.xlu0 %87
    %89 = vset.pattern.permute.xlu0 0
    %90 = vperm.xlu0 %89, %v67
    %v91 = vpop.permute.xlu0 %90
    %92 = vset.pattern.permute.xlu0 0
    %93 = vperm.xlu0 %92, %v68
    %v94 = vpop.permute.xlu0 %93
    %vm95 = vcmp.eq.s32.totalorder %v73, %v70
    %vm96 = vcmp.eq.s32.totalorder %v76, %v70
    %vm97 = vcmp.eq.s32.totalorder %v79, %v70
    %vm98 = vcmp.eq.s32.totalorder %v82, %v70
    %vm99 = vcmp.eq.s32.totalorder %v85, %v70
    %vm100 = vcmp.eq.s32.totalorder %v88, %v70
    %vm101 = vcmp.eq.s32.totalorder %v91, %v70
    %vm102 = vcmp.eq.s32.totalorder %v94, %v70
    %v103 = vsel %vm95, 1, 0
    %v104 = vsel %vm96, 1, 0
    %v105 = vsel %vm97, 1, 0
    %v106 = vsel %vm98, 1, 0
    %v107 = vsel %vm99, 1, 0
    %v108 = vsel %vm100, 1, 0
    %v109 = vsel %vm101, 1, 0
    %v110 = vsel %vm102, 1, 0
    %v111 = vcvt.s32.f32 %v103
    %v112 = vcvt.s32.f32 %v104
    %v113 = vcvt.s32.f32 %v105
    %v114 = vcvt.s32.f32 %v106
    %v115 = vcvt.s32.f32 %v107
    %v116 = vcvt.s32.f32 %v108
    %v117 = vcvt.s32.f32 %v109
    %v118 = vcvt.s32.f32 %v110
    %v119 = vld [vmem:[%s1] sm:$0xff]
    %v120 = vld [vmem:[%s1 + $0x8] sm:$0xff]
    %v121 = vld [vmem:[%s1 + $0x10] sm:$0xff]
    %v122 = vld [vmem:[%s1 + $0x18] sm:$0xff]
    %v123 = vld [vmem:[%s1 + $0x20] sm:$0xff]
    %v124 = vld [vmem:[%s1 + $0x28] sm:$0xff]
    %v125 = vld [vmem:[%s1 + $0x30] sm:$0xff]
    %v126 = vld [vmem:[%s1 + $0x38] sm:$0xff]
    %v127 = vld [vmem:[%s1 + $0x40] sm:$0xff]
    %v128 = vld [vmem:[%s1 + $0x48] sm:$0xff]
    %v129 = vld [vmem:[%s1 + $0x50] sm:$0xff]
    %v130 = vld [vmem:[%s1 + $0x58] sm:$0xff]
    %v131 = vld [vmem:[%s1 + $0x60] sm:$0xff]
    %v132 = vld [vmem:[%s1 + $0x68] sm:$0xff]
    %v133 = vld [vmem:[%s1 + $0x70] sm:$0xff]
    %v134 = vld [vmem:[%s1 + $0x78] sm:$0xff]
    %135 = vmatprep.subr.mxu0 0.0
    %136 = vmatpush1.msra.mxu0 %v119
    %137 = vmatprep.subr.mxu0 0.0
    %138 = vmatpush1.msra.mxu0 %v120
    %139 = vmatprep.subr.mxu0 0.0
    %140 = vmatpush1.msra.mxu0 %v121
    %141 = vmatprep.subr.mxu0 0.0
    %142 = vmatpush1.msra.mxu0 %v122
    %143 = vmatprep.subr.mxu0 0.0
    %144 = vmatpush1.msra.mxu0 %v123
    %145 = vmatprep.subr.mxu0 0.0
    %146 = vmatpush1.msra.mxu0 %v124
    %147 = vmatprep.subr.mxu0 0.0
    %148 = vmatpush1.msra.mxu0 %v125
    %149 = vmatprep.subr.mxu0 0.0
    %150 = vmatpush1.msra.mxu0 %v126
    %151 = vmatprep.subr.mxu0 0.0
    %152 = vmatpush1.msra.mxu0 %v127
    %153 = vmatprep.subr.mxu0 0.0
    %154 = vmatpush1.msra.mxu0 %v128
    %155 = vmatprep.subr.mxu0 0.0
    %156 = vmatpush1.msra.mxu0 %v129
    %157 = vmatprep.subr.mxu0 0.0
    %158 = vmatpush1.msra.mxu0 %v130
    %159 = vmatprep.subr.mxu0 0.0
    %160 = vmatpush1.msra.mxu0 %v131
    %161 = vmatprep.subr.mxu0 0.0
    %162 = vmatpush1.msra.mxu0 %v132
    %163 = vmatprep.subr.mxu0 0.0
    %164 = vmatpush1.msra.mxu0 %v133
    %165 = vmatprep.subr.mxu0 0.0
    %166 = vmatpush1.msra.mxu0 %v134
    %167 = vmatprep.subr.mxu0 0.0
    %168 = vmatpush1.msra.mxu0 0.0
    %169 = vmatprep.subr.mxu0 0.0
    %170 = vmatpush1.msra.mxu0 0.0
    %171 = vmatprep.subr.mxu0 0.0
    %172 = vmatpush1.msra.mxu0 0.0
    %173 = vmatprep.subr.mxu0 0.0
    %174 = vmatpush1.msra.mxu0 0.0
    %175 = vmatprep.subr.mxu0 0.0
    %176 = vmatpush1.msra.mxu0 0.0
    %177 = vmatprep.subr.mxu0 0.0
    %178 = vmatpush1.msra.mxu0 0.0
    %179 = vmatprep.subr.mxu0 0.0
    %180 = vmatpush1.msra.mxu0 0.0
    %181 = vmatprep.subr.mxu0 0.0
    %182 = vmatpush1.msra.mxu0 0.0
    %183 = vmatprep.subr.mxu0 0.0
    %184 = vmatpush1.msra.mxu0 0.0
    %185 = vmatprep.subr.mxu0 0.0
    %186 = vmatpush1.msra.mxu0 0.0
    %187 = vmatprep.subr.mxu0 0.0
    %188 = vmatpush1.msra.mxu0 0.0
    %189 = vmatprep.subr.mxu0 0.0
    %190 = vmatpush1.msra.mxu0 0.0
    %191 = vmatprep.subr.mxu0 0.0
    %192 = vmatpush1.msra.mxu0 0.0
    %193 = vmatprep.subr.mxu0 0.0
    %194 = vmatpush1.msra.mxu0 0.0
    %195 = vmatprep.subr.mxu0 0.0
    %196 = vmatpush1.msra.mxu0 0.0
    %197 = vmatprep.subr.mxu0 0.0
    %198 = vmatpush1.msra.mxu0 0.0
    %199 = vmatprep.mubr.f32.mxu0 0.0
    %200 = vmatmul.mubr.f32.gmra.mrb[0].mxu0 %v111
    %v201 = vpop.f32.mrb[0].mxu0
    %v202 = vadd.f32 0.0, %v201
    %v203 = vpop.f32.mrb[0].mxu0
    %204 = vmatprep.mubr.f32.mxu0 0.0
    %205 = vmatmul.mubr.f32.gmra.mrb[0].mxu0 %v112
    %v206 = vpop.f32.mrb[0].mxu0
    %v207 = vadd.f32 0.0, %v206
    %v208 = vpop.f32.mrb[0].mxu0
    %209 = vmatprep.mubr.f32.mxu0 0.0
    %210 = vmatmul.mubr.f32.gmra.mrb[0].mxu0 %v113
    %v211 = vpop.f32.mrb[0].mxu0
    %v212 = vadd.f32 0.0, %v211
    %v213 = vpop.f32.mrb[0].mxu0
    %214 = vmatprep.mubr.f32.mxu0 0.0
    %215 = vmatmul.mubr.f32.gmra.mrb[0].mxu0 %v114
    %v216 = vpop.f32.mrb[0].mxu0
    %v217 = vadd.f32 0.0, %v216
    %v218 = vpop.f32.mrb[0].mxu0
    %219 = vmatprep.mubr.f32.mxu0 0.0
    %220 = vmatmul.mubr.f32.gmra.mrb[0].mxu0 %v115
    %v221 = vpop.f32.mrb[0].mxu0
    %v222 = vadd.f32 0.0, %v221
    %v223 = vpop.f32.mrb[0].mxu0
    %224 = vmatprep.mubr.f32.mxu0 0.0
    %225 = vmatmul.mubr.f32.gmra.mrb[0].mxu0 %v116
    %v226 = vpop.f32.mrb[0].mxu0
    %v227 = vadd.f32 0.0, %v226
    %v228 = vpop.f32.mrb[0].mxu0
    %229 = vmatprep.mubr.f32.mxu0 0.0
    %230 = vmatmul.mubr.f32.gmra.mrb[0].mxu0 %v117
    %v231 = vpop.f32.mrb[0].mxu0
    %v232 = vadd.f32 0.0, %v231
    %v233 = vpop.f32.mrb[0].mxu0
    %234 = vmatprep.mubr.f32.mxu0 0.0
    %235 = vmatmul.mubr.f32.gmra.mrb[0].mxu0 %v118
    %v236 = vpop.f32.mrb[0].mxu0
    %v237 = vadd.f32 0.0, %v236
    %v238 = vpop.f32.mrb[0].mxu0
    %239 = vdwg.mxu0
    %v240 = vld [vmem:[%s2] sm:$0xff]
    %v241 = vld [vmem:[%s2 + $0x8] sm:$0xff]
    %v242 = vld [vmem:[%s2 + $0x10] sm:$0xff]
    %v243 = vld [vmem:[%s2 + $0x18] sm:$0xff]
    %v244 = vld [vmem:[%s2 + $0x20] sm:$0xff]
    %v245 = vld [vmem:[%s2 + $0x28] sm:$0xff]
    %v246 = vld [vmem:[%s2 + $0x30] sm:$0xff]
    %v247 = vld [vmem:[%s2 + $0x38] sm:$0xff]
    %v248 = vld [vmem:[%s2 + $0x40] sm:$0xff]
    %v249 = vld [vmem:[%s2 + $0x48] sm:$0xff]
    %v250 = vld [vmem:[%s2 + $0x50] sm:$0xff]
    %v251 = vld [vmem:[%s2 + $0x58] sm:$0xff]
    %v252 = vld [vmem:[%s2 + $0x60] sm:$0xff]
    %v253 = vld [vmem:[%s2 + $0x68] sm:$0xff]
    %v254 = vld [vmem:[%s2 + $0x70] sm:$0xff]
    %v255 = vld [vmem:[%s2 + $0x78] sm:$0xff]
    %v256 = vld [vmem:[%s2 + $0x80] sm:$0xff]
    %v257 = vld [vmem:[%s2 + $0x88] sm:$0xff]
    %v258 = vld [vmem:[%s2 + $0x90] sm:$0xff]
    %v259 = vld [vmem:[%s2 + $0x98] sm:$0xff]
    %v260 = vld [vmem:[%s2 + $0xa0] sm:$0xff]
    %v261 = vld [vmem:[%s2 + $0xa8] sm:$0xff]
    %v262 = vld [vmem:[%s2 + $0xb0] sm:$0xff]
    %v263 = vld [vmem:[%s2 + $0xb8] sm:$0xff]
    %v264 = vld [vmem:[%s3] sm:$0x3f]
    %v266 = vlaneseq
    %v267 = vshrl.u32 %v266, 7
    %v268 = vsub.s32 0, %v267
    %v269 = vrot.slane %v264, %v268
    %v270 = vlaneseq
    %v271 = vshrl.u32 %v270, 7
    %v272 = vsub.s32 1, %v271
    %v273 = vrot.slane %v264, %v272
    %v274 = vlaneseq
    %v275 = vshrl.u32 %v274, 7
    %v276 = vsub.s32 2, %v275
    %v277 = vrot.slane %v264, %v276
    %v278 = vlaneseq
    %v279 = vshrl.u32 %v278, 7
    %v280 = vsub.s32 3, %v279
    %v281 = vrot.slane %v264, %v280
    %v282 = vlaneseq
    %v283 = vshrl.u32 %v282, 7
    %v284 = vsub.s32 4, %v283
    %v285 = vrot.slane %v264, %v284
    %v286 = vlaneseq
    %v287 = vshrl.u32 %v286, 7
    %v288 = vsub.s32 5, %v287
    %v289 = vrot.slane %v264, %v288
    %vm296 = vcmask 261120
    %v298 = vsel %vm296, %v202, 0
    %v301 = vsel %vm296, %v207, 0
    %v304 = vsel %vm296, %v212, 0
    %v307 = vsel %vm296, %v217, 0
    %v310 = vsel %vm296, %v222, 0
    %v313 = vsel %vm296, %v227, 0
    %v316 = vsel %vm296, %v232, 0
    %v319 = vsel %vm296, %v237, 0
    %321 = vmatprep.subr.mxu0 %v241
    %322 = vmatpush1.msra.mxu0 %v240
    %323 = vmatprep.subr.mxu0 %v247
    %324 = vmatpush1.msra.mxu0 %v246
    %325 = vmatprep.subr.mxu0 %v253
    %326 = vmatpush1.msra.mxu0 %v252
    %327 = vmatprep.subr.mxu0 %v259
    %328 = vmatpush1.msra.mxu0 %v258
    %329 = vmatprep.subr.mxu0 0.0
    %330 = vmatpush1.msra.mxu0 0.0
    %331 = vmatprep.subr.mxu0 0.0
    %332 = vmatpush1.msra.mxu0 0.0
    %333 = vmatprep.subr.mxu0 0.0
    %334 = vmatpush1.msra.mxu0 0.0
    %335 = vmatprep.subr.mxu0 0.0
    %336 = vmatpush1.msra.mxu0 0.0
    %337 = vmatprep.subr.mxu0 0.0
    %338 = vmatpush1.msra.mxu0 0.0
    %339 = vmatprep.subr.mxu0 0.0
    %340 = vmatpush1.msra.mxu0 0.0
    %341 = vmatprep.subr.mxu0 0.0
    %342 = vmatpush1.msra.mxu0 0.0
    %343 = vmatprep.subr.mxu0 0.0
    %344 = vmatpush1.msra.mxu0 0.0
    %345 = vmatprep.subr.mxu0 0.0
    %346 = vmatpush1.msra.mxu0 0.0
    %347 = vmatprep.subr.mxu0 0.0
    %348 = vmatpush1.msra.mxu0 0.0
    %349 = vmatprep.subr.mxu0 0.0
    %350 = vmatpush1.msra.mxu0 0.0
    %351 = vmatprep.subr.mxu0 0.0
    %352 = vmatpush1.msra.mxu0 0.0
    %353 = vmatprep.subr.mxu0 0.0
    %354 = vmatpush1.msra.mxu0 0.0
    %355 = vmatprep.subr.mxu0 0.0
    %356 = vmatpush1.msra.mxu0 0.0
    %357 = vmatprep.subr.mxu0 0.0
    %358 = vmatpush1.msra.mxu0 0.0
    %359 = vmatprep.subr.mxu0 0.0
    %360 = vmatpush1.msra.mxu0 0.0
    %361 = vmatprep.subr.mxu0 0.0
    %362 = vmatpush1.msra.mxu0 0.0
    %363 = vmatprep.subr.mxu0 0.0
    %364 = vmatpush1.msra.mxu0 0.0
    %365 = vmatprep.subr.mxu0 0.0
    %366 = vmatpush1.msra.mxu0 0.0
    %367 = vmatprep.subr.mxu0 0.0
    %368 = vmatpush1.msra.mxu0 0.0
    %369 = vmatprep.subr.mxu0 0.0
    %370 = vmatpush1.msra.mxu0 0.0
    %371 = vmatprep.subr.mxu0 0.0
    %372 = vmatpush1.msra.mxu0 0.0
    %373 = vmatprep.subr.mxu0 0.0
    %374 = vmatpush1.msra.mxu0 0.0
    %375 = vmatprep.subr.mxu0 0.0
    %376 = vmatpush1.msra.mxu0 0.0
    %377 = vmatprep.subr.mxu0 0.0
    %378 = vmatpush1.msra.mxu0 0.0
    %379 = vmatprep.subr.mxu0 0.0
    %380 = vmatpush1.msra.mxu0 0.0
    %381 = vmatprep.subr.mxu0 0.0
    %382 = vmatpush1.msra.mxu0 0.0
    %383 = vmatprep.subr.mxu0 0.0
    %384 = vmatpush1.msra.mxu0 0.0
    %385 = vmatprep.mubr.f32.mxu0 0.0
    %386 = vmatmul.mubr.f32.gmra.mrb[0].mxu0 %v298
    %v387 = vpop.f32.mrb[0].mxu0
    %v388 = vadd.f32 %v269, %v387
    %v389 = vpop.f32.mrb[0].mxu0
    %v390 = vadd.f32 %v273, %v389
    %391 = vmatprep.mubr.f32.mxu0 0.0
    %392 = vmatmul.mubr.f32.gmra.mrb[0].mxu0 %v301
    %v393 = vpop.f32.mrb[0].mxu0
    %v394 = vadd.f32 %v269, %v393
    %v395 = vpop.f32.mrb[0].mxu0
    %v396 = vadd.f32 %v273, %v395
    %397 = vmatprep.mubr.f32.mxu0 0.0
    %398 = vmatmul.mubr.f32.gmra.mrb[0].mxu0 %v304
    %v399 = vpop.f32.mrb[0].mxu0
    %v400 = vadd.f32 %v269, %v399
    %v401 = vpop.f32.mrb[0].mxu0
    %v402 = vadd.f32 %v273, %v401
    %403 = vmatprep.mubr.f32.mxu0 0.0
    %404 = vmatmul.mubr.f32.gmra.mrb[0].mxu0 %v307
    %v405 = vpop.f32.mrb[0].mxu0
    %v406 = vadd.f32 %v269, %v405
    %v407 = vpop.f32.mrb[0].mxu0
    %v408 = vadd.f32 %v273, %v407
    %409 = vmatprep.mubr.f32.mxu0 0.0
    %410 = vmatmul.mubr.f32.gmra.mrb[0].mxu0 %v310
    %v411 = vpop.f32.mrb[0].mxu0
    %v412 = vadd.f32 %v269, %v411
    %v413 = vpop.f32.mrb[0].mxu0
    %v414 = vadd.f32 %v273, %v413
    %415 = vmatprep.mubr.f32.mxu0 0.0
    %416 = vmatmul.mubr.f32.gmra.mrb[0].mxu0 %v313
    %v417 = vpop.f32.mrb[0].mxu0
    %v418 = vadd.f32 %v269, %v417
    %v419 = vpop.f32.mrb[0].mxu0
    %v420 = vadd.f32 %v273, %v419
    %421 = vmatprep.mubr.f32.mxu0 0.0
    %422 = vmatmul.mubr.f32.gmra.mrb[0].mxu0 %v316
    %v423 = vpop.f32.mrb[0].mxu0
    %v424 = vadd.f32 %v269, %v423
    %v425 = vpop.f32.mrb[0].mxu0
    %v426 = vadd.f32 %v273, %v425
    %427 = vmatprep.mubr.f32.mxu0 0.0
    %428 = vmatmul.mubr.f32.gmra.mrb[0].mxu0 %v319
    %v429 = vpop.f32.mrb[0].mxu0
    %v430 = vadd.f32 %v269, %v429
    %v431 = vpop.f32.mrb[0].mxu0
    %v432 = vadd.f32 %v273, %v431
    %433 = vdwg.mxu0
    %434 = vmatprep.subr.mxu0 %v243
    %435 = vmatpush1.msra.mxu0 %v242
    %436 = vmatprep.subr.mxu0 %v249
    %437 = vmatpush1.msra.mxu0 %v248
    %438 = vmatprep.subr.mxu0 %v255
    %439 = vmatpush1.msra.mxu0 %v254
    %440 = vmatprep.subr.mxu0 %v261
    %441 = vmatpush1.msra.mxu0 %v260
    %442 = vmatprep.subr.mxu0 0.0
    %443 = vmatpush1.msra.mxu0 0.0
    %444 = vmatprep.subr.mxu0 0.0
    %445 = vmatpush1.msra.mxu0 0.0
    %446 = vmatprep.subr.mxu0 0.0
    %447 = vmatpush1.msra.mxu0 0.0
    %448 = vmatprep.subr.mxu0 0.0
    %449 = vmatpush1.msra.mxu0 0.0
    %450 = vmatprep.subr.mxu0 0.0
    %451 = vmatpush1.msra.mxu0 0.0
    %452 = vmatprep.subr.mxu0 0.0
    %453 = vmatpush1.msra.mxu0 0.0
    %454 = vmatprep.subr.mxu0 0.0
    %455 = vmatpush1.msra.mxu0 0.0
    %456 = vmatprep.subr.mxu0 0.0
    %457 = vmatpush1.msra.mxu0 0.0
    %458 = vmatprep.subr.mxu0 0.0
    %459 = vmatpush1.msra.mxu0 0.0
    %460 = vmatprep.subr.mxu0 0.0
    %461 = vmatpush1.msra.mxu0 0.0
    %462 = vmatprep.subr.mxu0 0.0
    %463 = vmatpush1.msra.mxu0 0.0
    %464 = vmatprep.subr.mxu0 0.0
    %465 = vmatpush1.msra.mxu0 0.0
    %466 = vmatprep.subr.mxu0 0.0
    %467 = vmatpush1.msra.mxu0 0.0
    %468 = vmatprep.subr.mxu0 0.0
    %469 = vmatpush1.msra.mxu0 0.0
    %470 = vmatprep.subr.mxu0 0.0
    %471 = vmatpush1.msra.mxu0 0.0
    %472 = vmatprep.subr.mxu0 0.0
    %473 = vmatpush1.msra.mxu0 0.0
    %474 = vmatprep.subr.mxu0 0.0
    %475 = vmatpush1.msra.mxu0 0.0
    %476 = vmatprep.subr.mxu0 0.0
    %477 = vmatpush1.msra.mxu0 0.0
    %478 = vmatprep.subr.mxu0 0.0
    %479 = vmatpush1.msra.mxu0 0.0
    %480 = vmatprep.subr.mxu0 0.0
    %481 = vmatpush1.msra.mxu0 0.0
    %482 = vmatprep.subr.mxu0 0.0
    %483 = vmatpush1.msra.mxu0 0.0
    %484 = vmatprep.subr.mxu0 0.0
    %485 = vmatpush1.msra.mxu0 0.0
    %486 = vmatprep.subr.mxu0 0.0
    %487 = vmatpush1.msra.mxu0 0.0
    %488 = vmatprep.subr.mxu0 0.0
    %489 = vmatpush1.msra.mxu0 0.0
    %490 = vmatprep.subr.mxu0 0.0
    %491 = vmatpush1.msra.mxu0 0.0
    %492 = vmatprep.subr.mxu0 0.0
    %493 = vmatpush1.msra.mxu0 0.0
    %494 = vmatprep.subr.mxu0 0.0
    %495 = vmatpush1.msra.mxu0 0.0
    %496 = vmatprep.subr.mxu0 0.0
    %497 = vmatpush1.msra.mxu0 0.0
    %498 = vmatprep.mubr.f32.mxu0 0.0
    %499 = vmatmul.mubr.f32.gmra.mrb[0].mxu0 %v298
    %v500 = vpop.f32.mrb[0].mxu0
    %v501 = vadd.f32 %v277, %v500
    %v502 = vpop.f32.mrb[0].mxu0
    %503 = vmatprep.mubr.f32.mxu0 0.0
    %504 = vmatmul.mubr.f32.gmra.mrb[0].mxu0 %v301
    %v505 = vpop.f32.mrb[0].mxu0
    %v506 = vadd.f32 %v277, %v505
    %v507 = vpop.f32.mrb[0].mxu0
    %508 = vmatprep.mubr.f32.mxu0 0.0
    %509 = vmatmul.mubr.f32.gmra.mrb[0].mxu0 %v304
    %v510 = vpop.f32.mrb[0].mxu0
    %v511 = vadd.f32 %v277, %v510
    %v512 = vpop.f32.mrb[0].mxu0
    %513 = vmatprep.mubr.f32.mxu0 0.0
    %514 = vmatmul.mubr.f32.gmra.mrb[0].mxu0 %v307
    %v515 = vpop.f32.mrb[0].mxu0
    %v516 = vadd.f32 %v277, %v515
    %v517 = vpop.f32.mrb[0].mxu0
    %518 = vmatprep.mubr.f32.mxu0 0.0
    %519 = vmatmul.mubr.f32.gmra.mrb[0].mxu0 %v310
    %v520 = vpop.f32.mrb[0].mxu0
    %v521 = vadd.f32 %v277, %v520
    %v522 = vpop.f32.mrb[0].mxu0
    %523 = vmatprep.mubr.f32.mxu0 0.0
    %524 = vmatmul.mubr.f32.gmra.mrb[0].mxu0 %v313
    %v525 = vpop.f32.mrb[0].mxu0
    %v526 = vadd.f32 %v277, %v525
    %v527 = vpop.f32.mrb[0].mxu0
    %528 = vmatprep.mubr.f32.mxu0 0.0
    %529 = vmatmul.mubr.f32.gmra.mrb[0].mxu0 %v316
    %v530 = vpop.f32.mrb[0].mxu0
    %v531 = vadd.f32 %v277, %v530
    %v532 = vpop.f32.mrb[0].mxu0
    %533 = vmatprep.mubr.f32.mxu0 0.0
    %534 = vmatmul.mubr.f32.gmra.mrb[0].mxu0 %v319
    %v535 = vpop.f32.mrb[0].mxu0
    %v536 = vadd.f32 %v277, %v535
    %v537 = vpop.f32.mrb[0].mxu0
    %v538 = vadd.f32 %v281, %v537
    %539 = vdwg.mxu0
    %540 = vmatprep.subr.mxu0 %v245
    %541 = vmatpush1.msra.mxu0 %v244
    %542 = vmatprep.subr.mxu0 %v251
    %543 = vmatpush1.msra.mxu0 %v250
    %544 = vmatprep.subr.mxu0 %v257
    %545 = vmatpush1.msra.mxu0 %v256
    %546 = vmatprep.subr.mxu0 %v263
    %547 = vmatpush1.msra.mxu0 %v262
    %548 = vmatprep.subr.mxu0 0.0
    %549 = vmatpush1.msra.mxu0 0.0
    %550 = vmatprep.subr.mxu0 0.0
    %551 = vmatpush1.msra.mxu0 0.0
    %552 = vmatprep.subr.mxu0 0.0
    %553 = vmatpush1.msra.mxu0 0.0
    %554 = vmatprep.subr.mxu0 0.0
    %555 = vmatpush1.msra.mxu0 0.0
    %556 = vmatprep.subr.mxu0 0.0
    %557 = vmatpush1.msra.mxu0 0.0
    %558 = vmatprep.subr.mxu0 0.0
    %559 = vmatpush1.msra.mxu0 0.0
    %560 = vmatprep.subr.mxu0 0.0
    %561 = vmatpush1.msra.mxu0 0.0
    %562 = vmatprep.subr.mxu0 0.0
    %563 = vmatpush1.msra.mxu0 0.0
    %564 = vmatprep.subr.mxu0 0.0
    %565 = vmatpush1.msra.mxu0 0.0
    %566 = vmatprep.subr.mxu0 0.0
    %567 = vmatpush1.msra.mxu0 0.0
    %568 = vmatprep.subr.mxu0 0.0
    %569 = vmatpush1.msra.mxu0 0.0
    %570 = vmatprep.subr.mxu0 0.0
    %571 = vmatpush1.msra.mxu0 0.0
    %572 = vmatprep.subr.mxu0 0.0
    %573 = vmatpush1.msra.mxu0 0.0
    %574 = vmatprep.subr.mxu0 0.0
    %575 = vmatpush1.msra.mxu0 0.0
    %576 = vmatprep.subr.mxu0 0.0
    %577 = vmatpush1.msra.mxu0 0.0
    %578 = vmatprep.subr.mxu0 0.0
    %579 = vmatpush1.msra.mxu0 0.0
    %580 = vmatprep.subr.mxu0 0.0
    %581 = vmatpush1.msra.mxu0 0.0
    %582 = vmatprep.subr.mxu0 0.0
    %583 = vmatpush1.msra.mxu0 0.0
    %584 = vmatprep.subr.mxu0 0.0
    %585 = vmatpush1.msra.mxu0 0.0
    %586 = vmatprep.subr.mxu0 0.0
    %587 = vmatpush1.msra.mxu0 0.0
    %588 = vmatprep.subr.mxu0 0.0
    %589 = vmatpush1.msra.mxu0 0.0
    %590 = vmatprep.subr.mxu0 0.0
    %591 = vmatpush1.msra.mxu0 0.0
    %592 = vmatprep.subr.mxu0 0.0
    %593 = vmatpush1.msra.mxu0 0.0
    %594 = vmatprep.subr.mxu0 0.0
    %595 = vmatpush1.msra.mxu0 0.0
    %596 = vmatprep.subr.mxu0 0.0
    %597 = vmatpush1.msra.mxu0 0.0
    %598 = vmatprep.subr.mxu0 0.0
    %599 = vmatpush1.msra.mxu0 0.0
    %600 = vmatprep.subr.mxu0 0.0
    %601 = vmatpush1.msra.mxu0 0.0
    %602 = vmatprep.subr.mxu0 0.0
    %603 = vmatpush1.msra.mxu0 0.0
    %604 = vmatprep.mubr.f32.mxu0 0.0
    %605 = vmatmul.mubr.f32.gmra.mrb[0].mxu0 %v298
    %v606 = vpop.f32.mrb[0].mxu0
    %v607 = vpop.f32.mrb[0].mxu0
    %608 = vmatprep.mubr.f32.mxu0 0.0
    %609 = vmatmul.mubr.f32.gmra.mrb[0].mxu0 %v301
    %v610 = vpop.f32.mrb[0].mxu0
    %v611 = vpop.f32.mrb[0].mxu0
    %612 = vmatprep.mubr.f32.mxu0 0.0
    %613 = vmatmul.mubr.f32.gmra.mrb[0].mxu0 %v304
    %v614 = vpop.f32.mrb[0].mxu0
    %v615 = vpop.f32.mrb[0].mxu0
    %616 = vmatprep.mubr.f32.mxu0 0.0
    %617 = vmatmul.mubr.f32.gmra.mrb[0].mxu0 %v307
    %v618 = vpop.f32.mrb[0].mxu0
    %v619 = vpop.f32.mrb[0].mxu0
    %620 = vmatprep.mubr.f32.mxu0 0.0
    %621 = vmatmul.mubr.f32.gmra.mrb[0].mxu0 %v310
    %v622 = vpop.f32.mrb[0].mxu0
    %v623 = vpop.f32.mrb[0].mxu0
    %624 = vmatprep.mubr.f32.mxu0 0.0
    %625 = vmatmul.mubr.f32.gmra.mrb[0].mxu0 %v313
    %v626 = vpop.f32.mrb[0].mxu0
    %v627 = vpop.f32.mrb[0].mxu0
    %628 = vmatprep.mubr.f32.mxu0 0.0
    %629 = vmatmul.mubr.f32.gmra.mrb[0].mxu0 %v316
    %v630 = vpop.f32.mrb[0].mxu0
    %v631 = vpop.f32.mrb[0].mxu0
    %632 = vmatprep.mubr.f32.mxu0 0.0
    %633 = vmatmul.mubr.f32.gmra.mrb[0].mxu0 %v319
    %v634 = vpop.f32.mrb[0].mxu0
    %v635 = vadd.f32 %v285, %v634
    %v636 = vpop.f32.mrb[0].mxu0
    %v637 = vadd.f32 %v289, %v636
    %638 = vdwg.mxu0
    %v639 = vld [vmem:[#allocation2] sm:$0xff]
    %v640 = vld [vmem:[#allocation2 + $0x8] sm:$0xff]
    %v641 = vld [vmem:[#allocation2 + $0x10] sm:$0xff]
    %v642 = vld [vmem:[#allocation2 + $0x18] sm:$0xff]
    %v643 = vld [vmem:[#allocation2 + $0x20] sm:$0xff]
    %v644 = vld [vmem:[#allocation2 + $0x28] sm:$0xff]
    %v645 = vld [vmem:[#allocation2 + $0x30] sm:$0xff]
    %v646 = vld [vmem:[#allocation2 + $0x38] sm:$0xff]
    %v647 = vld [vmem:[#allocation2 + $0x40] sm:$0xff]
    %v648 = vld [vmem:[#allocation2 + $0x48] sm:$0xff]
    %v649 = vld [vmem:[#allocation2 + $0x50] sm:$0xff]
    %v650 = vld [vmem:[#allocation2 + $0x58] sm:$0xff]
    %v651 = vld [vmem:[#allocation2 + $0x60] sm:$0xff]
    %v652 = vld [vmem:[#allocation2 + $0x68] sm:$0xff]
    %v653 = vld [vmem:[#allocation2 + $0x70] sm:$0xff]
    %v654 = vld [vmem:[#allocation2 + $0x78] sm:$0xff]
    %v655 = vld [vmem:[#allocation2 + $0x80] sm:$0xff]
    %v656 = vld [vmem:[#allocation2 + $0x88] sm:$0xff]
    %v657 = vld [vmem:[#allocation2 + $0x90] sm:$0xff]
    %v658 = vld [vmem:[#allocation2 + $0x98] sm:$0xff]
    %v659 = vld [vmem:[#allocation2 + $0xa0] sm:$0xff]
    %v660 = vld [vmem:[#allocation2 + $0xa8] sm:$0xff]
    %v661 = vld [vmem:[#allocation2 + $0xb0] sm:$0xff]
    %v662 = vld [vmem:[#allocation2 + $0xb8] sm:$0xff]
    %v663 = vld [vmem:[#allocation2 + $0xc0] sm:$0xff]
    %v664 = vld [vmem:[#allocation2 + $0xc8] sm:$0xff]
    %v665 = vld [vmem:[#allocation2 + $0xd0] sm:$0xff]
    %v666 = vld [vmem:[#allocation2 + $0xd8] sm:$0xff]
    %v667 = vld [vmem:[#allocation2 + $0xe0] sm:$0xff]
    %v668 = vld [vmem:[#allocation2 + $0xe8] sm:$0xff]
    %v669 = vld [vmem:[#allocation2 + $0xf0] sm:$0xff]
    %v670 = vld [vmem:[#allocation2 + $0xf8] sm:$0xff]
    %v671 = vld [vmem:[#allocation2 + $0x100] sm:$0xff]
    %v672 = vld [vmem:[#allocation2 + $0x108] sm:$0xff]
    %v673 = vld [vmem:[#allocation2 + $0x110] sm:$0xff]
    %v674 = vld [vmem:[#allocation2 + $0x118] sm:$0xff]
    %v675 = vld [vmem:[#allocation2 + $0x120] sm:$0xff]
    %v676 = vld [vmem:[#allocation2 + $0x128] sm:$0xff]
    %v677 = vld [vmem:[#allocation2 + $0x130] sm:$0xff]
    %v678 = vld [vmem:[#allocation2 + $0x138] sm:$0xff]
    %v679 = vld [vmem:[#allocation2 + $0x140] sm:$0xff]
    %v680 = vld [vmem:[#allocation2 + $0x148] sm:$0xff]
    %v681 = vld [vmem:[#allocation2 + $0x150] sm:$0xff]
    %v682 = vld [vmem:[#allocation2 + $0x158] sm:$0xff]
    %v683 = vld [vmem:[#allocation2 + $0x160] sm:$0xff]
    %v684 = vld [vmem:[#allocation2 + $0x168] sm:$0xff]
    %v685 = vld [vmem:[#allocation2 + $0x170] sm:$0xff]
    %v686 = vld [vmem:[#allocation2 + $0x178] sm:$0xff]
    %v687 = vld [vmem:[%s5] sm:$0x1]
    %v689 = vlaneseq
    %v690 = vshrl.u32 %v689, 7
    %v691 = vsub.s32 0, %v690
    %v692 = vrot.slane %v687, %v691
    %v694 = vld [vmem:[%s6] sm:$0x1]
    %v696 = vlaneseq
    %v697 = vshrl.u32 %v696, 7
    %v698 = vsub.s32 0, %v697
    %v699 = vrot.slane %v694, %v698
    %701 = vmatprep.subr.mxu0 %v640
    %702 = vmatpush1.msra.mxu0 %v639
    %703 = vmatprep.subr.mxu0 %v643
    %704 = vmatpush1.msra.mxu0 %v642
    %705 = vmatprep.subr.mxu0 %v646
    %706 = vmatpush1.msra.mxu0 %v645
    %707 = vmatprep.subr.mxu0 %v649
    %708 = vmatpush1.msra.mxu0 %v648
    %709 = vmatprep.subr.mxu0 %v652
    %710 = vmatpush1.msra.mxu0 %v651
    %711 = vmatprep.subr.mxu0 %v655
    %712 = vmatpush1.msra.mxu0 %v654
    %713 = vmatprep.subr.mxu0 %v658
    %714 = vmatpush1.msra.mxu0 %v657
    %715 = vmatprep.subr.mxu0 %v661
    %716 = vmatpush1.msra.mxu0 %v660
    %717 = vmatprep.subr.mxu0 %v664
    %718 = vmatpush1.msra.mxu0 %v663
    %719 = vmatprep.subr.mxu0 %v667
    %720 = vmatpush1.msra.mxu0 %v666
    %721 = vmatprep.subr.mxu0 %v670
    %722 = vmatpush1.msra.mxu0 %v669
    %723 = vmatprep.subr.mxu0 %v673
    %724 = vmatpush1.msra.mxu0 %v672
    %725 = vmatprep.subr.mxu0 %v676
    %726 = vmatpush1.msra.mxu0 %v675
    %727 = vmatprep.subr.mxu0 %v679
    %728 = vmatpush1.msra.mxu0 %v678
    %729 = vmatprep.subr.mxu0 %v682
    %730 = vmatpush1.msra.mxu0 %v681
    %731 = vmatprep.subr.mxu0 %v685
    %732 = vmatpush1.msra.mxu0 %v684
    %733 = vmatprep.subr.mxu0 0.0
    %734 = vmatpush1.msra.mxu0 0.0
    %735 = vmatprep.subr.mxu0 0.0
    %736 = vmatpush1.msra.mxu0 0.0
    %737 = vmatprep.subr.mxu0 0.0
    %738 = vmatpush1.msra.mxu0 0.0
    %739 = vmatprep.subr.mxu0 0.0
    %740 = vmatpush1.msra.mxu0 0.0
    %741 = vmatprep.subr.mxu0 0.0
    %742 = vmatpush1.msra.mxu0 0.0
    %743 = vmatprep.subr.mxu0 0.0
    %744 = vmatpush1.msra.mxu0 0.0
    %745 = vmatprep.subr.mxu0 0.0
    %746 = vmatpush1.msra.mxu0 0.0
    %747 = vmatprep.subr.mxu0 0.0
    %748 = vmatpush1.msra.mxu0 0.0
    %749 = vmatprep.subr.mxu0 0.0
    %750 = vmatpush1.msra.mxu0 0.0
    %751 = vmatprep.subr.mxu0 0.0
    %752 = vmatpush1.msra.mxu0 0.0
    %753 = vmatprep.subr.mxu0 0.0
    %754 = vmatpush1.msra.mxu0 0.0
    %755 = vmatprep.subr.mxu0 0.0
    %756 = vmatpush1.msra.mxu0 0.0
    %757 = vmatprep.subr.mxu0 0.0
    %758 = vmatpush1.msra.mxu0 0.0
    %759 = vmatprep.subr.mxu0 0.0
    %760 = vmatpush1.msra.mxu0 0.0
    %761 = vmatprep.subr.mxu0 0.0
    %762 = vmatpush1.msra.mxu0 0.0
    %763 = vmatprep.subr.mxu0 0.0
    %764 = vmatpush1.msra.mxu0 0.0
    %765 = vmatprep.mubr.f32.mxu0 0.0
    %766 = vmatmul.mubr.f32.gmra.mrb[0].mxu0 0.0
    %v767 = vpop.f32.mrb[0].mxu0
    %v768 = vadd.f32 0.0, %v767
    %v769 = vpop.f32.mrb[0].mxu0
    %v770 = vadd.f32 0.0, %v769
    %771 = vdwg.mxu0
    %772 = vmatprep.subr.mxu0 0.0
    %773 = vmatpush1.msra.mxu0 %v641
    %774 = vmatprep.subr.mxu0 0.0
    %775 = vmatpush1.msra.mxu0 %v644
    %776 = vmatprep.subr.mxu0 0.0
    %777 = vmatpush1.msra.mxu0 %v647
    %778 = vmatprep.subr.mxu0 0.0
    %779 = vmatpush1.msra.mxu0 %v650
    %780 = vmatprep.subr.mxu0 0.0
    %781 = vmatpush1.msra.mxu0 %v653
    %782 = vmatprep.subr.mxu0 0.0
    %783 = vmatpush1.msra.mxu0 %v656
    %784 = vmatprep.subr.mxu0 0.0
    %785 = vmatpush1.msra.mxu0 %v659
    %786 = vmatprep.subr.mxu0 0.0
    %787 = vmatpush1.msra.mxu0 %v662
    %788 = vmatprep.subr.mxu0 0.0
    %789 = vmatpush1.msra.mxu0 %v665
    %790 = vmatprep.subr.mxu0 0.0
    %791 = vmatpush1.msra.mxu0 %v668
    %792 = vmatprep.subr.mxu0 0.0
    %793 = vmatpush1.msra.mxu0 %v671
    %794 = vmatprep.subr.mxu0 0.0
    %795 = vmatpush1.msra.mxu0 %v674
    %796 = vmatprep.subr.mxu0 0.0
    %797 = vmatpush1.msra.mxu0 %v677
    %798 = vmatprep.subr.mxu0 0.0
    %799 = vmatpush1.msra.mxu0 %v680
    %800 = vmatprep.subr.mxu0 0.0
    %801 = vmatpush1.msra.mxu0 %v683
    %802 = vmatprep.subr.mxu0 0.0
    %803 = vmatpush1.msra.mxu0 %v686
    %804 = vmatprep.subr.mxu0 0.0
    %805 = vmatpush1.msra.mxu0 0.0
    %806 = vmatprep.subr.mxu0 0.0
    %807 = vmatpush1.msra.mxu0 0.0
    %808 = vmatprep.subr.mxu0 0.0
    %809 = vmatpush1.msra.mxu0 0.0
    %810 = vmatprep.subr.mxu0 0.0
    %811 = vmatpush1.msra.mxu0 0.0
    %812 = vmatprep.subr.mxu0 0.0
    %813 = vmatpush1.msra.mxu0 0.0
    %814 = vmatprep.subr.mxu0 0.0
    %815 = vmatpush1.msra.mxu0 0.0
    %816 = vmatprep.subr.mxu0 0.0
    %817 = vmatpush1.msra.mxu0 0.0
    %818 = vmatprep.subr.mxu0 0.0
    %819 = vmatpush1.msra.mxu0 0.0
    %820 = vmatprep.subr.mxu0 0.0
    %821 = vmatpush1.msra.mxu0 0.0
    %822 = vmatprep.subr.mxu0 0.0
    %823 = vmatpush1.msra.mxu0 0.0
    %824 = vmatprep.subr.mxu0 0.0
    %825 = vmatpush1.msra.mxu0 0.0
    %826 = vmatprep.subr.mxu0 0.0
    %827 = vmatpush1.msra.mxu0 0.0
    %828 = vmatprep.subr.mxu0 0.0
    %829 = vmatpush1.msra.mxu0 0.0
    %830 = vmatprep.subr.mxu0 0.0
    %831 = vmatpush1.msra.mxu0 0.0
    %832 = vmatprep.subr.mxu0 0.0
    %833 = vmatpush1.msra.mxu0 0.0
    %834 = vmatprep.subr.mxu0 0.0
    %835 = vmatpush1.msra.mxu0 0.0
    %836 = vmatprep.mubr.f32.mxu0 0.0
    %837 = vmatmul.mubr.f32.gmra.mrb[0].mxu0 0.0
    %v838 = vpop.f32.mrb[0].mxu0
    %v839 = vadd.f32 0.0, %v838
    %v840 = vpop.f32.mrb[0].mxu0
    %841 = vdwg.mxu0
    %v842 = vadd.f32 %v388, %v768
    %v843 = vxor.u32 %v842, 2147483648
    %v844 = vmul.f32 %v843, 1.442695
    %v845 = vpow.pop %v844
    %v846 = vadd.f32 %v845, 1.0
    %v847 = vrcp.pop %v846
    %v848 = vmul.f32 1.0, %v847
    %v849 = vadd.f32 %v390, %v770
    %v850 = vxor.u32 %v849, 2147483648
    %v851 = vmul.f32 %v850, 1.442695
    %v852 = vpow.pop %v851
    %v853 = vadd.f32 %v852, 1.0
    %v854 = vrcp.pop %v853
    %v855 = vmul.f32 1.0, %v854
    %v856 = vadd.f32 %v839, %v692
    %v857 = vmul.f32 %v848, %v856
    %v858 = vadd.f32 %v501, %v857
    %v859 = vtanh.pop %v858
    %v860 = vsub.f32 1.0, %v855
    %v861 = vmul.f32 %v860, %v859
    %v862 = vmul.f32 %v855, 0.0
    %v863 = vadd.f32 %v861, %v862
    %864 = vmatprep.subr.mxu0 %v640
    %865 = vmatpush1.msra.mxu0 %v639
    %866 = vmatprep.subr.mxu0 %v643
    %867 = vmatpush1.msra.mxu0 %v642
    %868 = vmatprep.subr.mxu0 %v646
    %869 = vmatpush1.msra.mxu0 %v645
    %870 = vmatprep.subr.mxu0 %v649
    %871 = vmatpush1.msra.mxu0 %v648
    %872 = vmatprep.subr.mxu0 %v652
    %873 = vmatpush1.msra.mxu0 %v651
    %874 = vmatprep.subr.mxu0 %v655
    %875 = vmatpush1.msra.mxu0 %v654
    %876 = vmatprep.subr.mxu0 %v658
    %877 = vmatpush1.msra.mxu0 %v657
    %878 = vmatprep.subr.mxu0 %v661
    %879 = vmatpush1.msra.mxu0 %v660
    %880 = vmatprep.subr.mxu0 %v664
    %881 = vmatpush1.msra.mxu0 %v663
    %882 = vmatprep.subr.mxu0 %v667
    %883 = vmatpush1.msra.mxu0 %v666
    %884 = vmatprep.subr.mxu0 %v670
    %885 = vmatpush1.msra.mxu0 %v669
    %886 = vmatprep.subr.mxu0 %v673
    %887 = vmatpush1.msra.mxu0 %v672
    %888 = vmatprep.subr.mxu0 %v676
    %889 = vmatpush1.msra.mxu0 %v675
    %890 = vmatprep.subr.mxu0 %v679
    %891 = vmatpush1.msra.mxu0 %v678
    %892 = vmatprep.subr.mxu0 %v682
    %893 = vmatpush1.msra.mxu0 %v681
    %894 = vmatprep.subr.mxu0 %v685
    %895 = vmatpush1.msra.mxu0 %v684
    %896 = vmatprep.subr.mxu0 0.0
    %897 = vmatpush1.msra.mxu0 0.0
    %898 = vmatprep.subr.mxu0 0.0
    %899 = vmatpush1.msra.mxu0 0.0
    %900 = vmatprep.subr.mxu0 0.0
    %901 = vmatpush1.msra.mxu0 0.0
    %902 = vmatprep.subr.mxu0 0.0
    %903 = vmatpush1.msra.mxu0 0.0
    %904 = vmatprep.subr.mxu0 0.0
    %905 = vmatpush1.msra.mxu0 0.0
    %906 = vmatprep.subr.mxu0 0.0
    %907 = vmatpush1.msra.mxu0 0.0
    %908 = vmatprep.subr.mxu0 0.0
    %909 = vmatpush1.msra.mxu0 0.0
    %910 = vmatprep.subr.mxu0 0.0
    %911 = vmatpush1.msra.mxu0 0.0
    %912 = vmatprep.subr.mxu0 0.0
    %913 = vmatpush1.msra.mxu0 0.0
    %914 = vmatprep.subr.mxu0 0.0
    %915 = vmatpush1.msra.mxu0 0.0
    %916 = vmatprep.subr.mxu0 0.0
    %917 = vmatpush1.msra.mxu0 0.0
    %918 = vmatprep.subr.mxu0 0.0
    %919 = vmatpush1.msra.mxu0 0.0
    %920 = vmatprep.subr.mxu0 0.0
    %921 = vmatpush1.msra.mxu0 0.0
    %922 = vmatprep.subr.mxu0 0.0
    %923 = vmatpush1.msra.mxu0 0.0
    %924 = vmatprep.subr.mxu0 0.0
    %925 = vmatpush1.msra.mxu0 0.0
    %926 = vmatprep.subr.mxu0 0.0
    %927 = vmatpush1.msra.mxu0 0.0
    %928 = vmatprep.mubr.f32.mxu0 0.0
    %929 = vmatmul.mubr.f32.gmra.mrb[0].mxu0 %v863
    %v930 = vpop.f32.mrb[0].mxu0
    %v931 = vadd.f32 0.0, %v930
    %v932 = vpop.f32.mrb[0].mxu0
    %v933 = vadd.f32 0.0, %v932
    %934 = vdwg.mxu0
    %935 = vmatprep.subr.mxu0 0.0
    %936 = vmatpush1.msra.mxu0 %v641
    %937 = vmatprep.subr.mxu0 0.0
    %938 = vmatpush1.msra.mxu0 %v644
    %939 = vmatprep.subr.mxu0 0.0
    %940 = vmatpush1.msra.mxu0 %v647
    %941 = vmatprep.subr.mxu0 0.0
    %942 = vmatpush1.msra.mxu0 %v650
    %943 = vmatprep.subr.mxu0 0.0
    %944 = vmatpush1.msra.mxu0 %v653
    %945 = vmatprep.subr.mxu0 0.0
    %946 = vmatpush1.msra.mxu0 %v656
    %947 = vmatprep.subr.mxu0 0.0
    %948 = vmatpush1.msra.mxu0 %v659
    %949 = vmatprep.subr.mxu0 0.0
    %950 = vmatpush1.msra.mxu0 %v662
    %951 = vmatprep.subr.mxu0 0.0
    %952 = vmatpush1.msra.mxu0 %v665
    %953 = vmatprep.subr.mxu0 0.0
    %954 = vmatpush1.msra.mxu0 %v668
    %955 = vmatprep.subr.mxu0 0.0
    %956 = vmatpush1.msra.mxu0 %v671
    %957 = vmatprep.subr.mxu0 0.0
    %958 = vmatpush1.msra.mxu0 %v674
    %959 = vmatprep.subr.mxu0 0.0
    %960 = vmatpush1.msra.mxu0 %v677
    %961 = vmatprep.subr.mxu0 0.0
    %962 = vmatpush1.msra.mxu0 %v680
    %963 = vmatprep.subr.mxu0 0.0
    %964 = vmatpush1.msra.mxu0 %v683
    %965 = vmatprep.subr.mxu0 0.0
    %966 = vmatpush1.msra.mxu0 %v686
    %967 = vmatprep.subr.mxu0 0.0
    %968 = vmatpush1.msra.mxu0 0.0
    %969 = vmatprep.subr.mxu0 0.0
    %970 = vmatpush1.msra.mxu0 0.0
    %971 = vmatprep.subr.mxu0 0.0
    %972 = vmatpush1.msra.mxu0 0.0
    %973 = vmatprep.subr.mxu0 0.0
    %974 = vmatpush1.msra.mxu0 0.0
    %975 = vmatprep.subr.mxu0 0.0
    %976 = vmatpush1.msra.mxu0 0.0
    %977 = vmatprep.subr.mxu0 0.0
    %978 = vmatpush1.msra.mxu0 0.0
    %979 = vmatprep.subr.mxu0 0.0
    %980 = vmatpush1.msra.mxu0 0.0
    %981 = vmatprep.subr.mxu0 0.0
    %982 = vmatpush1.msra.mxu0 0.0
    %983 = vmatprep.subr.mxu0 0.0
    %984 = vmatpush1.msra.mxu0 0.0
    %985 = vmatprep.subr.mxu0 0.0
    %986 = vmatpush1.msra.mxu0 0.0
    %987 = vmatprep.subr.mxu0 0.0
    %988 = vmatpush1.msra.mxu0 0.0
    %989 = vmatprep.subr.mxu0 0.0
    %990 = vmatpush1.msra.mxu0 0.0
    %991 = vmatprep.subr.mxu0 0.0
    %992 = vmatpush1.msra.mxu0 0.0
    %993 = vmatprep.subr.mxu0 0.0
    %994 = vmatpush1.msra.mxu0 0.0
    %995 = vmatprep.subr.mxu0 0.0
    %996 = vmatpush1.msra.mxu0 0.0
    %997 = vmatprep.subr.mxu0 0.0
    %998 = vmatpush1.msra.mxu0 0.0
    %999 = vmatprep.mubr.f32.mxu0 0.0
    %1000 = vmatmul.mubr.f32.gmra.mrb[0].mxu0 %v863
    %v1001 = vpop.f32.mrb[0].mxu0
    %v1002 = vadd.f32 0.0, %v1001
    %v1003 = vpop.f32.mrb[0].mxu0
    %1004 = vdwg.mxu0
    %v1005 = vadd.f32 %v394, %v931
    %v1006 = vxor.u32 %v1005, 2147483648
    %v1007 = vmul.f32 %v1006, 1.442695
    %v1008 = vpow.pop %v1007
    %v1009 = vadd.f32 %v1008, 1.0
    %v1010 = vrcp.pop %v1009
    %v1011 = vmul.f32 1.0, %v1010
    %v1012 = vadd.f32 %v396, %v933
    %v1013 = vxor.u32 %v1012, 2147483648
    %v1014 = vmul.f32 %v1013, 1.442695
    %v1015 = vpow.pop %v1014
    %v1016 = vadd.f32 %v1015, 1.0
    %v1017 = vrcp.pop %v1016
    %v1018 = vmul.f32 1.0, %v1017
    %v1019 = vadd.f32 %v1002, %v692
    %v1020 = vmul.f32 %v1011, %v1019
    %v1021 = vadd.f32 %v506, %v1020
    %v1022 = vtanh.pop %v1021
    %v1023 = vsub.f32 1.0, %v1018
    %v1024 = vmul.f32 %v1023, %v1022
    %v1025 = vmul.f32 %v1018, %v863
    %v1026 = vadd.f32 %v1024, %v1025
    %1027 = vmatprep.subr.mxu0 %v640
    %1028 = vmatpush1.msra.mxu0 %v639
    %1029 = vmatprep.subr.mxu0 %v643
    %1030 = vmatpush1.msra.mxu0 %v642
    %1031 = vmatprep.subr.mxu0 %v646
    %1032 = vmatpush1.msra.mxu0 %v645
    %1033 = vmatprep.subr.mxu0 %v649
    %1034 = vmatpush1.msra.mxu0 %v648
    %1035 = vmatprep.subr.mxu0 %v652
    %1036 = vmatpush1.msra.mxu0 %v651
    %1037 = vmatprep.subr.mxu0 %v655
    %1038 = vmatpush1.msra.mxu0 %v654
    %1039 = vmatprep.subr.mxu0 %v658
    %1040 = vmatpush1.msra.mxu0 %v657
    %1041 = vmatprep.subr.mxu0 %v661
    %1042 = vmatpush1.msra.mxu0 %v660
    %1043 = vmatprep.subr.mxu0 %v664
    %1044 = vmatpush1.msra.mxu0 %v663
    %1045 = vmatprep.subr.mxu0 %v667
    %1046 = vmatpush1.msra.mxu0 %v666
    %1047 = vmatprep.subr.mxu0 %v670
    %1048 = vmatpush1.msra.mxu0 %v669
    %1049 = vmatprep.subr.mxu0 %v673
    %1050 = vmatpush1.msra.mxu0 %v672
    %1051 = vmatprep.subr.mxu0 %v676
    %1052 = vmatpush1.msra.mxu0 %v675
    %1053 = vmatprep.subr.mxu0 %v679
    %1054 = vmatpush1.msra.mxu0 %v678
    %1055 = vmatprep.subr.mxu0 %v682
    %1056 = vmatpush1.msra.mxu0 %v681
    %1057 = vmatprep.subr.mxu0 %v685
    %1058 = vmatpush1.msra.mxu0 %v684
    %1059 = vmatprep.subr.mxu0 0.0
    %1060 = vmatpush1.msra.mxu0 0.0
    %1061 = vmatprep.subr.mxu0 0.0
    %1062 = vmatpush1.msra.mxu0 0.0
    %1063 = vmatprep.subr.mxu0 0.0
    %1064 = vmatpush1.msra.mxu0 0.0
    %1065 = vmatprep.subr.mxu0 0.0
    %1066 = vmatpush1.msra.mxu0 0.0
    %1067 = vmatprep.subr.mxu0 0.0
    %1068 = vmatpush1.msra.mxu0 0.0
    %1069 = vmatprep.subr.mxu0 0.0
    %1070 = vmatpush1.msra.mxu0 0.0
    %1071 = vmatprep.subr.mxu0 0.0
    %1072 = vmatpush1.msra.mxu0 0.0
    %1073 = vmatprep.subr.mxu0 0.0
    %1074 = vmatpush1.msra.mxu0 0.0
    %1075 = vmatprep.subr.mxu0 0.0
    %1076 = vmatpush1.msra.mxu0 0.0
    %1077 = vmatprep.subr.mxu0 0.0
    %1078 = vmatpush1.msra.mxu0 0.0
    %1079 = vmatprep.subr.mxu0 0.0
    %1080 = vmatpush1.msra.mxu0 0.0
    %1081 = vmatprep.subr.mxu0 0.0
    %1082 = vmatpush1.msra.mxu0 0.0
    %1083 = vmatprep.subr.mxu0 0.0
    %1084 = vmatpush1.msra.mxu0 0.0
    %1085 = vmatprep.subr.mxu0 0.0
    %1086 = vmatpush1.msra.mxu0 0.0
    %1087 = vmatprep.subr.mxu0 0.0
    %1088 = vmatpush1.msra.mxu0 0.0
    %1089 = vmatprep.subr.mxu0 0.0
    %1090 = vmatpush1.msra.mxu0 0.0
    %1091 = vmatprep.mubr.f32.mxu0 0.0
    %1092 = vmatmul.mubr.f32.gmra.mrb[0].mxu0 %v1026
    %v1093 = vpop.f32.mrb[0].mxu0
    %v1094 = vadd.f32 0.0, %v1093
    %v1095 = vpop.f32.mrb[0].mxu0
    %v1096 = vadd.f32 0.0, %v1095
    %1097 = vdwg.mxu0
    %1098 = vmatprep.subr.mxu0 0.0
    %1099 = vmatpush1.msra.mxu0 %v641
    %1100 = vmatprep.subr.mxu0 0.0
    %1101 = vmatpush1.msra.mxu0 %v644
    %1102 = vmatprep.subr.mxu0 0.0
    %1103 = vmatpush1.msra.mxu0 %v647
    %1104 = vmatprep.subr.mxu0 0.0
    %1105 = vmatpush1.msra.mxu0 %v650
    %1106 = vmatprep.subr.mxu0 0.0
    %1107 = vmatpush1.msra.mxu0 %v653
    %1108 = vmatprep.subr.mxu0 0.0
    %1109 = vmatpush1.msra.mxu0 %v656
    %1110 = vmatprep.subr.mxu0 0.0
    %1111 = vmatpush1.msra.mxu0 %v659
    %1112 = vmatprep.subr.mxu0 0.0
    %1113 = vmatpush1.msra.mxu0 %v662
    %1114 = vmatprep.subr.mxu0 0.0
    %1115 = vmatpush1.msra.mxu0 %v665
    %1116 = vmatprep.subr.mxu0 0.0
    %1117 = vmatpush1.msra.mxu0 %v668
    %1118 = vmatprep.subr.mxu0 0.0
    %1119 = vmatpush1.msra.mxu0 %v671
    %1120 = vmatprep.subr.mxu0 0.0
    %1121 = vmatpush1.msra.mxu0 %v674
    %1122 = vmatprep.subr.mxu0 0.0
    %1123 = vmatpush1.msra.mxu0 %v677
    %1124 = vmatprep.subr.mxu0 0.0
    %1125 = vmatpush1.msra.mxu0 %v680
    %1126 = vmatprep.subr.mxu0 0.0
    %1127 = vmatpush1.msra.mxu0 %v683
    %1128 = vmatprep.subr.mxu0 0.0
    %1129 = vmatpush1.msra.mxu0 %v686
    %1130 = vmatprep.subr.mxu0 0.0
    %1131 = vmatpush1.msra.mxu0 0.0
    %1132 = vmatprep.subr.mxu0 0.0
    %1133 = vmatpush1.msra.mxu0 0.0
    %1134 = vmatprep.subr.mxu0 0.0
    %1135 = vmatpush1.msra.mxu0 0.0
    %1136 = vmatprep.subr.mxu0 0.0
    %1137 = vmatpush1.msra.mxu0 0.0
    %1138 = vmatprep.subr.mxu0 0.0
    %1139 = vmatpush1.msra.mxu0 0.0
    %1140 = vmatprep.subr.mxu0 0.0
    %1141 = vmatpush1.msra.mxu0 0.0
    %1142 = vmatprep.subr.mxu0 0.0
    %1143 = vmatpush1.msra.mxu0 0.0
    %1144 = vmatprep.subr.mxu0 0.0
    %1145 = vmatpush1.msra.mxu0 0.0
    %1146 = vmatprep.subr.mxu0 0.0
    %1147 = vmatpush1.msra.mxu0 0.0
    %1148 = vmatprep.subr.mxu0 0.0
    %1149 = vmatpush1.msra.mxu0 0.0
    %1150 = vmatprep.subr.mxu0 0.0
    %1151 = vmatpush1.msra.mxu0 0.0
    %1152 = vmatprep.subr.mxu0 0.0
    %1153 = vmatpush1.msra.mxu0 0.0
    %1154 = vmatprep.subr.mxu0 0.0
    %1155 = vmatpush1.msra.mxu0 0.0
    %1156 = vmatprep.subr.mxu0 0.0
    %1157 = vmatpush1.msra.mxu0 0.0
    %1158 = vmatprep.subr.mxu0 0.0
    %1159 = vmatpush1.msra.mxu0 0.0
    %1160 = vmatprep.subr.mxu0 0.0
    %1161 = vmatpush1.msra.mxu0 0.0
    %1162 = vmatprep.mubr.f32.mxu0 0.0
    %1163 = vmatmul.mubr.f32.gmra.mrb[0].mxu0 %v1026
    %v1164 = vpop.f32.mrb[0].mxu0
    %v1165 = vadd.f32 0.0, %v1164
    %v1166 = vpop.f32.mrb[0].mxu0
    %1167 = vdwg.mxu0
    %v1168 = vadd.f32 %v400, %v1094
    %v1169 = vxor.u32 %v1168, 2147483648
    %v1170 = vmul.f32 %v1169, 1.442695
    %v1171 = vpow.pop %v1170
    %v1172 = vadd.f32 %v1171, 1.0
    %v1173 = vrcp.pop %v1172
    %v1174 = vmul.f32 1.0, %v1173
    %v1175 = vadd.f32 %v402, %v1096
    %v1176 = vxor.u32 %v1175, 2147483648
    %v1177 = vmul.f32 %v1176, 1.442695
    %v1178 = vpow.pop %v1177
    %v1179 = vadd.f32 %v1178, 1.0
    %v1180 = vrcp.pop %v1179
    %v1181 = vmul.f32 1.0, %v1180
    %v1182 = vadd.f32 %v1165, %v692
    %v1183 = vmul.f32 %v1174, %v1182
    %v1184 = vadd.f32 %v511, %v1183
    %v1185 = vtanh.pop %v1184
    %v1186 = vsub.f32 1.0, %v1181
    %v1187 = vmul.f32 %v1186, %v1185
    %v1188 = vmul.f32 %v1181, %v1026
    %v1189 = vadd.f32 %v1187, %v1188
    %1190 = vmatprep.subr.mxu0 %v640
    %1191 = vmatpush1.msra.mxu0 %v639
    %1192 = vmatprep.subr.mxu0 %v643
    %1193 = vmatpush1.msra.mxu0 %v642
    %1194 = vmatprep.subr.mxu0 %v646
    %1195 = vmatpush1.msra.mxu0 %v645
    %1196 = vmatprep.subr.mxu0 %v649
    %1197 = vmatpush1.msra.mxu0 %v648
    %1198 = vmatprep.subr.mxu0 %v652
    %1199 = vmatpush1.msra.mxu0 %v651
    %1200 = vmatprep.subr.mxu0 %v655
    %1201 = vmatpush1.msra.mxu0 %v654
    %1202 = vmatprep.subr.mxu0 %v658
    %1203 = vmatpush1.msra.mxu0 %v657
    %1204 = vmatprep.subr.mxu0 %v661
    %1205 = vmatpush1.msra.mxu0 %v660
    %1206 = vmatprep.subr.mxu0 %v664
    %1207 = vmatpush1.msra.mxu0 %v663
    %1208 = vmatprep.subr.mxu0 %v667
    %1209 = vmatpush1.msra.mxu0 %v666
    %1210 = vmatprep.subr.mxu0 %v670
    %1211 = vmatpush1.msra.mxu0 %v669
    %1212 = vmatprep.subr.mxu0 %v673
    %1213 = vmatpush1.msra.mxu0 %v672
    %1214 = vmatprep.subr.mxu0 %v676
    %1215 = vmatpush1.msra.mxu0 %v675
    %1216 = vmatprep.subr.mxu0 %v679
    %1217 = vmatpush1.msra.mxu0 %v678
    %1218 = vmatprep.subr.mxu0 %v682
    %1219 = vmatpush1.msra.mxu0 %v681
    %1220 = vmatprep.subr.mxu0 %v685
    %1221 = vmatpush1.msra.mxu0 %v684
    %1222 = vmatprep.subr.mxu0 0.0
    %1223 = vmatpush1.msra.mxu0 0.0
    %1224 = vmatprep.subr.mxu0 0.0
    %1225 = vmatpush1.msra.mxu0 0.0
    %1226 = vmatprep.subr.mxu0 0.0
    %1227 = vmatpush1.msra.mxu0 0.0
    %1228 = vmatprep.subr.mxu0 0.0
    %1229 = vmatpush1.msra.mxu0 0.0
    %1230 = vmatprep.subr.mxu0 0.0
    %1231 = vmatpush1.msra.mxu0 0.0
    %1232 = vmatprep.subr.mxu0 0.0
    %1233 = vmatpush1.msra.mxu0 0.0
    %1234 = vmatprep.subr.mxu0 0.0
    %1235 = vmatpush1.msra.mxu0 0.0
    %1236 = vmatprep.subr.mxu0 0.0
    %1237 = vmatpush1.msra.mxu0 0.0
    %1238 = vmatprep.subr.mxu0 0.0
    %1239 = vmatpush1.msra.mxu0 0.0
    %1240 = vmatprep.subr.mxu0 0.0
    %1241 = vmatpush1.msra.mxu0 0.0
    %1242 = vmatprep.subr.mxu0 0.0
    %1243 = vmatpush1.msra.mxu0 0.0
    %1244 = vmatprep.subr.mxu0 0.0
    %1245 = vmatpush1.msra.mxu0 0.0
    %1246 = vmatprep.subr.mxu0 0.0
    %1247 = vmatpush1.msra.mxu0 0.0
    %1248 = vmatprep.subr.mxu0 0.0
    %1249 = vmatpush1.msra.mxu0 0.0
    %1250 = vmatprep.subr.mxu0 0.0
    %1251 = vmatpush1.msra.mxu0 0.0
    %1252 = vmatprep.subr.mxu0 0.0
    %1253 = vmatpush1.msra.mxu0 0.0
    %1254 = vmatprep.mubr.f32.mxu0 0.0
    %1255 = vmatmul.mubr.f32.gmra.mrb[0].mxu0 %v1189
    %v1256 = vpop.f32.mrb[0].mxu0
    %v1257 = vadd.f32 0.0, %v1256
    %v1258 = vpop.f32.mrb[0].mxu0
    %v1259 = vadd.f32 0.0, %v1258
    %1260 = vdwg.mxu0
    %1261 = vmatprep.subr.mxu0 0.0
    %1262 = vmatpush1.msra.mxu0 %v641
    %1263 = vmatprep.subr.mxu0 0.0
    %1264 = vmatpush1.msra.mxu0 %v644
    %1265 = vmatprep.subr.mxu0 0.0
    %1266 = vmatpush1.msra.mxu0 %v647
    %1267 = vmatprep.subr.mxu0 0.0
    %1268 = vmatpush1.msra.mxu0 %v650
    %1269 = vmatprep.subr.mxu0 0.0
    %1270 = vmatpush1.msra.mxu0 %v653
    %1271 = vmatprep.subr.mxu0 0.0
    %1272 = vmatpush1.msra.mxu0 %v656
    %1273 = vmatprep.subr.mxu0 0.0
    %1274 = vmatpush1.msra.mxu0 %v659
    %1275 = vmatprep.subr.mxu0 0.0
    %1276 = vmatpush1.msra.mxu0 %v662
    %1277 = vmatprep.subr.mxu0 0.0
    %1278 = vmatpush1.msra.mxu0 %v665
    %1279 = vmatprep.subr.mxu0 0.0
    %1280 = vmatpush1.msra.mxu0 %v668
    %1281 = vmatprep.subr.mxu0 0.0
    %1282 = vmatpush1.msra.mxu0 %v671
    %1283 = vmatprep.subr.mxu0 0.0
    %1284 = vmatpush1.msra.mxu0 %v674
    %1285 = vmatprep.subr.mxu0 0.0
    %1286 = vmatpush1.msra.mxu0 %v677
    %1287 = vmatprep.subr.mxu0 0.0
    %1288 = vmatpush1.msra.mxu0 %v680
    %1289 = vmatprep.subr.mxu0 0.0
    %1290 = vmatpush1.msra.mxu0 %v683
    %1291 = vmatprep.subr.mxu0 0.0
    %1292 = vmatpush1.msra.mxu0 %v686
    %1293 = vmatprep.subr.mxu0 0.0
    %1294 = vmatpush1.msra.mxu0 0.0
    %1295 = vmatprep.subr.mxu0 0.0
    %1296 = vmatpush1.msra.mxu0 0.0
    %1297 = vmatprep.subr.mxu0 0.0
    %1298 = vmatpush1.msra.mxu0 0.0
    %1299 = vmatprep.subr.mxu0 0.0
    %1300 = vmatpush1.msra.mxu0 0.0
    %1301 = vmatprep.subr.mxu0 0.0
    %1302 = vmatpush1.msra.mxu0 0.0
    %1303 = vmatprep.subr.mxu0 0.0
    %1304 = vmatpush1.msra.mxu0 0.0
    %1305 = vmatprep.subr.mxu0 0.0
    %1306 = vmatpush1.msra.mxu0 0.0
    %1307 = vmatprep.subr.mxu0 0.0
    %1308 = vmatpush1.msra.mxu0 0.0
    %1309 = vmatprep.subr.mxu0 0.0
    %1310 = vmatpush1.msra.mxu0 0.0
    %1311 = vmatprep.subr.mxu0 0.0
    %1312 = vmatpush1.msra.mxu0 0.0
    %1313 = vmatprep.subr.mxu0 0.0
    %1314 = vmatpush1.msra.mxu0 0.0
    %1315 = vmatprep.subr.mxu0 0.0
    %1316 = vmatpush1.msra.mxu0 0.0
    %1317 = vmatprep.subr.mxu0 0.0
    %1318 = vmatpush1.msra.mxu0 0.0
    %1319 = vmatprep.subr.mxu0 0.0
    %1320 = vmatpush1.msra.mxu0 0.0
    %1321 = vmatprep.subr.mxu0 0.0
    %1322 = vmatpush1.msra.mxu0 0.0
    %1323 = vmatprep.subr.mxu0 0.0
    %1324 = vmatpush1.msra.mxu0 0.0
    %1325 = vmatprep.mubr.f32.mxu0 0.0
    %1326 = vmatmul.mubr.f32.gmra.mrb[0].mxu0 %v1189
    %v1327 = vpop.f32.mrb[0].mxu0
    %v1328 = vadd.f32 0.0, %v1327
    %v1329 = vpop.f32.mrb[0].mxu0
    %1330 = vdwg.mxu0
    %v1331 = vadd.f32 %v406, %v1257
    %v1332 = vxor.u32 %v1331, 2147483648
    %v1333 = vmul.f32 %v1332, 1.442695
    %v1334 = vpow.pop %v1333
    %v1335 = vadd.f32 %v1334, 1.0
    %v1336 = vrcp.pop %v1335
    %v1337 = vmul.f32 1.0, %v1336
    %v1338 = vadd.f32 %v408, %v1259
    %v1339 = vxor.u32 %v1338, 2147483648
    %v1340 = vmul.f32 %v1339, 1.442695
    %v1341 = vpow.pop %v1340
    %v1342 = vadd.f32 %v1341, 1.0
    %v1343 = vrcp.pop %v1342
    %v1344 = vmul.f32 1.0, %v1343
    %v1345 = vadd.f32 %v1328, %v692
    %v1346 = vmul.f32 %v1337, %v1345
    %v1347 = vadd.f32 %v516, %v1346
    %v1348 = vtanh.pop %v1347
    %v1349 = vsub.f32 1.0, %v1344
    %v1350 = vmul.f32 %v1349, %v1348
    %v1351 = vmul.f32 %v1344, %v1189
    %v1352 = vadd.f32 %v1350, %v1351
    %1353 = vmatprep.subr.mxu0 %v640
    %1354 = vmatpush1.msra.mxu0 %v639
    %1355 = vmatprep.subr.mxu0 %v643
    %1356 = vmatpush1.msra.mxu0 %v642
    %1357 = vmatprep.subr.mxu0 %v646
    %1358 = vmatpush1.msra.mxu0 %v645
    %1359 = vmatprep.subr.mxu0 %v649
    %1360 = vmatpush1.msra.mxu0 %v648
    %1361 = vmatprep.subr.mxu0 %v652
    %1362 = vmatpush1.msra.mxu0 %v651
    %1363 = vmatprep.subr.mxu0 %v655
    %1364 = vmatpush1.msra.mxu0 %v654
    %1365 = vmatprep.subr.mxu0 %v658
    %1366 = vmatpush1.msra.mxu0 %v657
    %1367 = vmatprep.subr.mxu0 %v661
    %1368 = vmatpush1.msra.mxu0 %v660
    %1369 = vmatprep.subr.mxu0 %v664
    %1370 = vmatpush1.msra.mxu0 %v663
    %1371 = vmatprep.subr.mxu0 %v667
    %1372 = vmatpush1.msra.mxu0 %v666
    %1373 = vmatprep.subr.mxu0 %v670
    %1374 = vmatpush1.msra.mxu0 %v669
    %1375 = vmatprep.subr.mxu0 %v673
    %1376 = vmatpush1.msra.mxu0 %v672
    %1377 = vmatprep.subr.mxu0 %v676
    %1378 = vmatpush1.msra.mxu0 %v675
    %1379 = vmatprep.subr.mxu0 %v679
    %1380 = vmatpush1.msra.mxu0 %v678
    %1381 = vmatprep.subr.mxu0 %v682
    %1382 = vmatpush1.msra.mxu0 %v681
    %1383 = vmatprep.subr.mxu0 %v685
    %1384 = vmatpush1.msra.mxu0 %v684
    %1385 = vmatprep.subr.mxu0 0.0
    %1386 = vmatpush1.msra.mxu0 0.0
    %1387 = vmatprep.subr.mxu0 0.0
    %1388 = vmatpush1.msra.mxu0 0.0
    %1389 = vmatprep.subr.mxu0 0.0
    %1390 = vmatpush1.msra.mxu0 0.0
    %1391 = vmatprep.subr.mxu0 0.0
    %1392 = vmatpush1.msra.mxu0 0.0
    %1393 = vmatprep.subr.mxu0 0.0
    %1394 = vmatpush1.msra.mxu0 0.0
    %1395 = vmatprep.subr.mxu0 0.0
    %1396 = vmatpush1.msra.mxu0 0.0
    %1397 = vmatprep.subr.mxu0 0.0
    %1398 = vmatpush1.msra.mxu0 0.0
    %1399 = vmatprep.subr.mxu0 0.0
    %1400 = vmatpush1.msra.mxu0 0.0
    %1401 = vmatprep.subr.mxu0 0.0
    %1402 = vmatpush1.msra.mxu0 0.0
    %1403 = vmatprep.subr.mxu0 0.0
    %1404 = vmatpush1.msra.mxu0 0.0
    %1405 = vmatprep.subr.mxu0 0.0
    %1406 = vmatpush1.msra.mxu0 0.0
    %1407 = vmatprep.subr.mxu0 0.0
    %1408 = vmatpush1.msra.mxu0 0.0
    %1409 = vmatprep.subr.mxu0 0.0
    %1410 = vmatpush1.msra.mxu0 0.0
    %1411 = vmatprep.subr.mxu0 0.0
    %1412 = vmatpush1.msra.mxu0 0.0
    %1413 = vmatprep.subr.mxu0 0.0
    %1414 = vmatpush1.msra.mxu0 0.0
    %1415 = vmatprep.subr.mxu0 0.0
    %1416 = vmatpush1.msra.mxu0 0.0
    %1417 = vmatprep.mubr.f32.mxu0 0.0
    %1418 = vmatmul.mubr.f32.gmra.mrb[0].mxu0 %v1352
    %v1419 = vpop.f32.mrb[0].mxu0
    %v1420 = vadd.f32 0.0, %v1419
    %v1421 = vpop.f32.mrb[0].mxu0
    %v1422 = vadd.f32 0.0, %v1421
    %1423 = vdwg.mxu0
    %1424 = vmatprep.subr.mxu0 0.0
    %1425 = vmatpush1.msra.mxu0 %v641
    %1426 = vmatprep.subr.mxu0 0.0
    %1427 = vmatpush1.msra.mxu0 %v644
    %1428 = vmatprep.subr.mxu0 0.0
    %1429 = vmatpush1.msra.mxu0 %v647
    %1430 = vmatprep.subr.mxu0 0.0
    %1431 = vmatpush1.msra.mxu0 %v650
    %1432 = vmatprep.subr.mxu0 0.0
    %1433 = vmatpush1.msra.mxu0 %v653
    %1434 = vmatprep.subr.mxu0 0.0
    %1435 = vmatpush1.msra.mxu0 %v656
    %1436 = vmatprep.subr.mxu0 0.0
    %1437 = vmatpush1.msra.mxu0 %v659
    %1438 = vmatprep.subr.mxu0 0.0
    %1439 = vmatpush1.msra.mxu0 %v662
    %1440 = vmatprep.subr.mxu0 0.0
    %1441 = vmatpush1.msra.mxu0 %v665
    %1442 = vmatprep.subr.mxu0 0.0
    %1443 = vmatpush1.msra.mxu0 %v668
    %1444 = vmatprep.subr.mxu0 0.0
    %1445 = vmatpush1.msra.mxu0 %v671
    %1446 = vmatprep.subr.mxu0 0.0
    %1447 = vmatpush1.msra.mxu0 %v674
    %1448 = vmatprep.subr.mxu0 0.0
    %1449 = vmatpush1.msra.mxu0 %v677
    %1450 = vmatprep.subr.mxu0 0.0
    %1451 = vmatpush1.msra.mxu0 %v680
    %1452 = vmatprep.subr.mxu0 0.0
    %1453 = vmatpush1.msra.mxu0 %v683
    %1454 = vmatprep.subr.mxu0 0.0
    %1455 = vmatpush1.msra.mxu0 %v686
    %1456 = vmatprep.subr.mxu0 0.0
    %1457 = vmatpush1.msra.mxu0 0.0
    %1458 = vmatprep.subr.mxu0 0.0
    %1459 = vmatpush1.msra.mxu0 0.0
    %1460 = vmatprep.subr.mxu0 0.0
    %1461 = vmatpush1.msra.mxu0 0.0
    %1462 = vmatprep.subr.mxu0 0.0
    %1463 = vmatpush1.msra.mxu0 0.0
    %1464 = vmatprep.subr.mxu0 0.0
    %1465 = vmatpush1.msra.mxu0 0.0
    %1466 = vmatprep.subr.mxu0 0.0
    %1467 = vmatpush1.msra.mxu0 0.0
    %1468 = vmatprep.subr.mxu0 0.0
    %1469 = vmatpush1.msra.mxu0 0.0
    %1470 = vmatprep.subr.mxu0 0.0
    %1471 = vmatpush1.msra.mxu0 0.0
    %1472 = vmatprep.subr.mxu0 0.0
    %1473 = vmatpush1.msra.mxu0 0.0
    %1474 = vmatprep.subr.mxu0 0.0
    %1475 = vmatpush1.msra.mxu0 0.0
    %1476 = vmatprep.subr.mxu0 0.0
    %1477 = vmatpush1.msra.mxu0 0.0
    %1478 = vmatprep.subr.mxu0 0.0
    %1479 = vmatpush1.msra.mxu0 0.0
    %1480 = vmatprep.subr.mxu0 0.0
    %1481 = vmatpush1.msra.mxu0 0.0
    %1482 = vmatprep.subr.mxu0 0.0
    %1483 = vmatpush1.msra.mxu0 0.0
    %1484 = vmatprep.subr.mxu0 0.0
    %1485 = vmatpush1.msra.mxu0 0.0
    %1486 = vmatprep.subr.mxu0 0.0
    %1487 = vmatpush1.msra.mxu0 0.0
    %1488 = vmatprep.mubr.f32.mxu0 0.0
    %1489 = vmatmul.mubr.f32.gmra.mrb[0].mxu0 %v1352
    %v1490 = vpop.f32.mrb[0].mxu0
    %v1491 = vadd.f32 0.0, %v1490
    %v1492 = vpop.f32.mrb[0].mxu0
    %1493 = vdwg.mxu0
    %v1494 = vadd.f32 %v412, %v1420
    %v1495 = vxor.u32 %v1494, 2147483648
    %v1496 = vmul.f32 %v1495, 1.442695
    %v1497 = vpow.pop %v1496
    %v1498 = vadd.f32 %v1497, 1.0
    %v1499 = vrcp.pop %v1498
    %v1500 = vmul.f32 1.0, %v1499
    %v1501 = vadd.f32 %v414, %v1422
    %v1502 = vxor.u32 %v1501, 2147483648
    %v1503 = vmul.f32 %v1502, 1.442695
    %v1504 = vpow.pop %v1503
    %v1505 = vadd.f32 %v1504, 1.0
    %v1506 = vrcp.pop %v1505
    %v1507 = vmul.f32 1.0, %v1506
    %v1508 = vadd.f32 %v1491, %v692
    %v1509 = vmul.f32 %v1500, %v1508
    %v1510 = vadd.f32 %v521, %v1509
    %v1511 = vtanh.pop %v1510
    %v1512 = vsub.f32 1.0, %v1507
    %v1513 = vmul.f32 %v1512, %v1511
    %v1514 = vmul.f32 %v1507, %v1352
    %v1515 = vadd.f32 %v1513, %v1514
    %1516 = vmatprep.subr.mxu0 %v640
    %1517 = vmatpush1.msra.mxu0 %v639
    %1518 = vmatprep.subr.mxu0 %v643
    %1519 = vmatpush1.msra.mxu0 %v642
    %1520 = vmatprep.subr.mxu0 %v646
    %1521 = vmatpush1.msra.mxu0 %v645
    %1522 = vmatprep.subr.mxu0 %v649
    %1523 = vmatpush1.msra.mxu0 %v648
    %1524 = vmatprep.subr.mxu0 %v652
    %1525 = vmatpush1.msra.mxu0 %v651
    %1526 = vmatprep.subr.mxu0 %v655
    %1527 = vmatpush1.msra.mxu0 %v654
    %1528 = vmatprep.subr.mxu0 %v658
    %1529 = vmatpush1.msra.mxu0 %v657
    %1530 = vmatprep.subr.mxu0 %v661
    %1531 = vmatpush1.msra.mxu0 %v660
    %1532 = vmatprep.subr.mxu0 %v664
    %1533 = vmatpush1.msra.mxu0 %v663
    %1534 = vmatprep.subr.mxu0 %v667
    %1535 = vmatpush1.msra.mxu0 %v666
    %1536 = vmatprep.subr.mxu0 %v670
    %1537 = vmatpush1.msra.mxu0 %v669
    %1538 = vmatprep.subr.mxu0 %v673
    %1539 = vmatpush1.msra.mxu0 %v672
    %1540 = vmatprep.subr.mxu0 %v676
    %1541 = vmatpush1.msra.mxu0 %v675
    %1542 = vmatprep.subr.mxu0 %v679
    %1543 = vmatpush1.msra.mxu0 %v678
    %1544 = vmatprep.subr.mxu0 %v682
    %1545 = vmatpush1.msra.mxu0 %v681
    %1546 = vmatprep.subr.mxu0 %v685
    %1547 = vmatpush1.msra.mxu0 %v684
    %1548 = vmatprep.subr.mxu0 0.0
    %1549 = vmatpush1.msra.mxu0 0.0
    %1550 = vmatprep.subr.mxu0 0.0
    %1551 = vmatpush1.msra.mxu0 0.0
    %1552 = vmatprep.subr.mxu0 0.0
    %1553 = vmatpush1.msra.mxu0 0.0
    %1554 = vmatprep.subr.mxu0 0.0
    %1555 = vmatpush1.msra.mxu0 0.0
    %1556 = vmatprep.subr.mxu0 0.0
    %1557 = vmatpush1.msra.mxu0 0.0
    %1558 = vmatprep.subr.mxu0 0.0
    %1559 = vmatpush1.msra.mxu0 0.0
    %1560 = vmatprep.subr.mxu0 0.0
    %1561 = vmatpush1.msra.mxu0 0.0
    %1562 = vmatprep.subr.mxu0 0.0
    %1563 = vmatpush1.msra.mxu0 0.0
    %1564 = vmatprep.subr.mxu0 0.0
    %1565 = vmatpush1.msra.mxu0 0.0
    %1566 = vmatprep.subr.mxu0 0.0
    %1567 = vmatpush1.msra.mxu0 0.0
    %1568 = vmatprep.subr.mxu0 0.0
    %1569 = vmatpush1.msra.mxu0 0.0
    %1570 = vmatprep.subr.mxu0 0.0
    %1571 = vmatpush1.msra.mxu0 0.0
    %1572 = vmatprep.subr.mxu0 0.0
    %1573 = vmatpush1.msra.mxu0 0.0
    %1574 = vmatprep.subr.mxu0 0.0
    %1575 = vmatpush1.msra.mxu0 0.0
    %1576 = vmatprep.subr.mxu0 0.0
    %1577 = vmatpush1.msra.mxu0 0.0
    %1578 = vmatprep.subr.mxu0 0.0
    %1579 = vmatpush1.msra.mxu0 0.0
    %1580 = vmatprep.mubr.f32.mxu0 0.0
    %1581 = vmatmul.mubr.f32.gmra.mrb[0].mxu0 %v1515
    %v1582 = vpop.f32.mrb[0].mxu0
    %v1583 = vadd.f32 0.0, %v1582
    %v1584 = vpop.f32.mrb[0].mxu0
    %v1585 = vadd.f32 0.0, %v1584
    %1586 = vdwg.mxu0
    %1587 = vmatprep.subr.mxu0 0.0
    %1588 = vmatpush1.msra.mxu0 %v641
    %1589 = vmatprep.subr.mxu0 0.0
    %1590 = vmatpush1.msra.mxu0 %v644
    %1591 = vmatprep.subr.mxu0 0.0
    %1592 = vmatpush1.msra.mxu0 %v647
    %1593 = vmatprep.subr.mxu0 0.0
    %1594 = vmatpush1.msra.mxu0 %v650
    %1595 = vmatprep.subr.mxu0 0.0
    %1596 = vmatpush1.msra.mxu0 %v653
    %1597 = vmatprep.subr.mxu0 0.0
    %1598 = vmatpush1.msra.mxu0 %v656
    %1599 = vmatprep.subr.mxu0 0.0
    %1600 = vmatpush1.msra.mxu0 %v659
    %1601 = vmatprep.subr.mxu0 0.0
    %1602 = vmatpush1.msra.mxu0 %v662
    %1603 = vmatprep.subr.mxu0 0.0
    %1604 = vmatpush1.msra.mxu0 %v665
    %1605 = vmatprep.subr.mxu0 0.0
    %1606 = vmatpush1.msra.mxu0 %v668
    %1607 = vmatprep.subr.mxu0 0.0
    %1608 = vmatpush1.msra.mxu0 %v671
    %1609 = vmatprep.subr.mxu0 0.0
    %1610 = vmatpush1.msra.mxu0 %v674
    %1611 = vmatprep.subr.mxu0 0.0
    %1612 = vmatpush1.msra.mxu0 %v677
    %1613 = vmatprep.subr.mxu0 0.0
    %1614 = vmatpush1.msra.mxu0 %v680
    %1615 = vmatprep.subr.mxu0 0.0
    %1616 = vmatpush1.msra.mxu0 %v683
    %1617 = vmatprep.subr.mxu0 0.0
    %1618 = vmatpush1.msra.mxu0 %v686
    %1619 = vmatprep.subr.mxu0 0.0
    %1620 = vmatpush1.msra.mxu0 0.0
    %1621 = vmatprep.subr.mxu0 0.0
    %1622 = vmatpush1.msra.mxu0 0.0
    %1623 = vmatprep.subr.mxu0 0.0
    %1624 = vmatpush1.msra.mxu0 0.0
    %1625 = vmatprep.subr.mxu0 0.0
    %1626 = vmatpush1.msra.mxu0 0.0
    %1627 = vmatprep.subr.mxu0 0.0
    %1628 = vmatpush1.msra.mxu0 0.0
    %1629 = vmatprep.subr.mxu0 0.0
    %1630 = vmatpush1.msra.mxu0 0.0
    %1631 = vmatprep.subr.mxu0 0.0
    %1632 = vmatpush1.msra.mxu0 0.0
    %1633 = vmatprep.subr.mxu0 0.0
    %1634 = vmatpush1.msra.mxu0 0.0
    %1635 = vmatprep.subr.mxu0 0.0
    %1636 = vmatpush1.msra.mxu0 0.0
    %1637 = vmatprep.subr.mxu0 0.0
    %1638 = vmatpush1.msra.mxu0 0.0
    %1639 = vmatprep.subr.mxu0 0.0
    %1640 = vmatpush1.msra.mxu0 0.0
    %1641 = vmatprep.subr.mxu0 0.0
    %1642 = vmatpush1.msra.mxu0 0.0
    %1643 = vmatprep.subr.mxu0 0.0
    %1644 = vmatpush1.msra.mxu0 0.0
    %1645 = vmatprep.subr.mxu0 0.0
    %1646 = vmatpush1.msra.mxu0 0.0
    %1647 = vmatprep.subr.mxu0 0.0
    %1648 = vmatpush1.msra.mxu0 0.0
    %1649 = vmatprep.subr.mxu0 0.0
    %1650 = vmatpush1.msra.mxu0 0.0
    %1651 = vmatprep.mubr.f32.mxu0 0.0
    %1652 = vmatmul.mubr.f32.gmra.mrb[0].mxu0 %v1515
    %v1653 = vpop.f32.mrb[0].mxu0
    %v1654 = vadd.f32 0.0, %v1653
    %v1655 = vpop.f32.mrb[0].mxu0
    %1656 = vdwg.mxu0
    %v1657 = vadd.f32 %v418, %v1583
    %v1658 = vxor.u32 %v1657, 2147483648
    %v1659 = vmul.f32 %v1658, 1.442695
    %v1660 = vpow.pop %v1659
    %v1661 = vadd.f32 %v1660, 1.0
    %v1662 = vrcp.pop %v1661
    %v1663 = vmul.f32 1.0, %v1662
    %v1664 = vadd.f32 %v420, %v1585
    %v1665 = vxor.u32 %v1664, 2147483648
    %v1666 = vmul.f32 %v1665, 1.442695
    %v1667 = vpow.pop %v1666
    %v1668 = vadd.f32 %v1667, 1.0
    %v1669 = vrcp.pop %v1668
    %v1670 = vmul.f32 1.0, %v1669
    %v1671 = vadd.f32 %v1654, %v692
    %v1672 = vmul.f32 %v1663, %v1671
    %v1673 = vadd.f32 %v526, %v1672
    %v1674 = vtanh.pop %v1673
    %v1675 = vsub.f32 1.0, %v1670
    %v1676 = vmul.f32 %v1675, %v1674
    %v1677 = vmul.f32 %v1670, %v1515
    %v1678 = vadd.f32 %v1676, %v1677
    %1679 = vmatprep.subr.mxu0 %v640
    %1680 = vmatpush1.msra.mxu0 %v639
    %1681 = vmatprep.subr.mxu0 %v643
    %1682 = vmatpush1.msra.mxu0 %v642
    %1683 = vmatprep.subr.mxu0 %v646
    %1684 = vmatpush1.msra.mxu0 %v645
    %1685 = vmatprep.subr.mxu0 %v649
    %1686 = vmatpush1.msra.mxu0 %v648
    %1687 = vmatprep.subr.mxu0 %v652
    %1688 = vmatpush1.msra.mxu0 %v651
    %1689 = vmatprep.subr.mxu0 %v655
    %1690 = vmatpush1.msra.mxu0 %v654
    %1691 = vmatprep.subr.mxu0 %v658
    %1692 = vmatpush1.msra.mxu0 %v657
    %1693 = vmatprep.subr.mxu0 %v661
    %1694 = vmatpush1.msra.mxu0 %v660
    %1695 = vmatprep.subr.mxu0 %v664
    %1696 = vmatpush1.msra.mxu0 %v663
    %1697 = vmatprep.subr.mxu0 %v667
    %1698 = vmatpush1.msra.mxu0 %v666
    %1699 = vmatprep.subr.mxu0 %v670
    %1700 = vmatpush1.msra.mxu0 %v669
    %1701 = vmatprep.subr.mxu0 %v673
    %1702 = vmatpush1.msra.mxu0 %v672
    %1703 = vmatprep.subr.mxu0 %v676
    %1704 = vmatpush1.msra.mxu0 %v675
    %1705 = vmatprep.subr.mxu0 %v679
    %1706 = vmatpush1.msra.mxu0 %v678
    %1707 = vmatprep.subr.mxu0 %v682
    %1708 = vmatpush1.msra.mxu0 %v681
    %1709 = vmatprep.subr.mxu0 %v685
    %1710 = vmatpush1.msra.mxu0 %v684
    %1711 = vmatprep.subr.mxu0 0.0
    %1712 = vmatpush1.msra.mxu0 0.0
    %1713 = vmatprep.subr.mxu0 0.0
    %1714 = vmatpush1.msra.mxu0 0.0
    %1715 = vmatprep.subr.mxu0 0.0
    %1716 = vmatpush1.msra.mxu0 0.0
    %1717 = vmatprep.subr.mxu0 0.0
    %1718 = vmatpush1.msra.mxu0 0.0
    %1719 = vmatprep.subr.mxu0 0.0
    %1720 = vmatpush1.msra.mxu0 0.0
    %1721 = vmatprep.subr.mxu0 0.0
    %1722 = vmatpush1.msra.mxu0 0.0
    %1723 = vmatprep.subr.mxu0 0.0
    %1724 = vmatpush1.msra.mxu0 0.0
    %1725 = vmatprep.subr.mxu0 0.0
    %1726 = vmatpush1.msra.mxu0 0.0
    %1727 = vmatprep.subr.mxu0 0.0
    %1728 = vmatpush1.msra.mxu0 0.0
    %1729 = vmatprep.subr.mxu0 0.0
    %1730 = vmatpush1.msra.mxu0 0.0
    %1731 = vmatprep.subr.mxu0 0.0
    %1732 = vmatpush1.msra.mxu0 0.0
    %1733 = vmatprep.subr.mxu0 0.0
    %1734 = vmatpush1.msra.mxu0 0.0
    %1735 = vmatprep.subr.mxu0 0.0
    %1736 = vmatpush1.msra.mxu0 0.0
    %1737 = vmatprep.subr.mxu0 0.0
    %1738 = vmatpush1.msra.mxu0 0.0
    %1739 = vmatprep.subr.mxu0 0.0
    %1740 = vmatpush1.msra.mxu0 0.0
    %1741 = vmatprep.subr.mxu0 0.0
    %1742 = vmatpush1.msra.mxu0 0.0
    %1743 = vmatprep.mubr.f32.mxu0 0.0
    %1744 = vmatmul.mubr.f32.gmra.mrb[0].mxu0 %v1678
    %v1745 = vpop.f32.mrb[0].mxu0
    %v1746 = vadd.f32 0.0, %v1745
    %v1747 = vpop.f32.mrb[0].mxu0
    %v1748 = vadd.f32 0.0, %v1747
    %1749 = vdwg.mxu0
    %1750 = vmatprep.subr.mxu0 0.0
    %1751 = vmatpush1.msra.mxu0 %v641
    %1752 = vmatprep.subr.mxu0 0.0
    %1753 = vmatpush1.msra.mxu0 %v644
    %1754 = vmatprep.subr.mxu0 0.0
    %1755 = vmatpush1.msra.mxu0 %v647
    %1756 = vmatprep.subr.mxu0 0.0
    %1757 = vmatpush1.msra.mxu0 %v650
    %1758 = vmatprep.subr.mxu0 0.0
    %1759 = vmatpush1.msra.mxu0 %v653
    %1760 = vmatprep.subr.mxu0 0.0
    %1761 = vmatpush1.msra.mxu0 %v656
    %1762 = vmatprep.subr.mxu0 0.0
    %1763 = vmatpush1.msra.mxu0 %v659
    %1764 = vmatprep.subr.mxu0 0.0
    %1765 = vmatpush1.msra.mxu0 %v662
    %1766 = vmatprep.subr.mxu0 0.0
    %1767 = vmatpush1.msra.mxu0 %v665
    %1768 = vmatprep.subr.mxu0 0.0
    %1769 = vmatpush1.msra.mxu0 %v668
    %1770 = vmatprep.subr.mxu0 0.0
    %1771 = vmatpush1.msra.mxu0 %v671
    %1772 = vmatprep.subr.mxu0 0.0
    %1773 = vmatpush1.msra.mxu0 %v674
    %1774 = vmatprep.subr.mxu0 0.0
    %1775 = vmatpush1.msra.mxu0 %v677
    %1776 = vmatprep.subr.mxu0 0.0
    %1777 = vmatpush1.msra.mxu0 %v680
    %1778 = vmatprep.subr.mxu0 0.0
    %1779 = vmatpush1.msra.mxu0 %v683
    %1780 = vmatprep.subr.mxu0 0.0
    %1781 = vmatpush1.msra.mxu0 %v686
    %1782 = vmatprep.subr.mxu0 0.0
    %1783 = vmatpush1.msra.mxu0 0.0
    %1784 = vmatprep.subr.mxu0 0.0
    %1785 = vmatpush1.msra.mxu0 0.0
    %1786 = vmatprep.subr.mxu0 0.0
    %1787 = vmatpush1.msra.mxu0 0.0
    %1788 = vmatprep.subr.mxu0 0.0
    %1789 = vmatpush1.msra.mxu0 0.0
    %1790 = vmatprep.subr.mxu0 0.0
    %1791 = vmatpush1.msra.mxu0 0.0
    %1792 = vmatprep.subr.mxu0 0.0
    %1793 = vmatpush1.msra.mxu0 0.0
    %1794 = vmatprep.subr.mxu0 0.0
    %1795 = vmatpush1.msra.mxu0 0.0
    %1796 = vmatprep.subr.mxu0 0.0
    %1797 = vmatpush1.msra.mxu0 0.0
    %1798 = vmatprep.subr.mxu0 0.0
    %1799 = vmatpush1.msra.mxu0 0.0
    %1800 = vmatprep.subr.mxu0 0.0
    %1801 = vmatpush1.msra.mxu0 0.0
    %1802 = vmatprep.subr.mxu0 0.0
    %1803 = vmatpush1.msra.mxu0 0.0
    %1804 = vmatprep.subr.mxu0 0.0
    %1805 = vmatpush1.msra.mxu0 0.0
    %1806 = vmatprep.subr.mxu0 0.0
    %1807 = vmatpush1.msra.mxu0 0.0
    %1808 = vmatprep.subr.mxu0 0.0
    %1809 = vmatpush1.msra.mxu0 0.0
    %1810 = vmatprep.subr.mxu0 0.0
    %1811 = vmatpush1.msra.mxu0 0.0
    %1812 = vmatprep.subr.mxu0 0.0
    %1813 = vmatpush1.msra.mxu0 0.0
    %1814 = vmatprep.mubr.f32.mxu0 0.0
    %1815 = vmatmul.mubr.f32.gmra.mrb[0].mxu0 %v1678
    %v1816 = vpop.f32.mrb[0].mxu0
    %v1817 = vadd.f32 0.0, %v1816
    %v1818 = vpop.f32.mrb[0].mxu0
    %1819 = vdwg.mxu0
    %v1820 = vadd.f32 %v424, %v1746
    %v1821 = vxor.u32 %v1820, 2147483648
    %v1822 = vmul.f32 %v1821, 1.442695
    %v1823 = vpow.pop %v1822
    %v1824 = vadd.f32 %v1823, 1.0
    %v1825 = vrcp.pop %v1824
    %v1826 = vmul.f32 1.0, %v1825
    %v1827 = vadd.f32 %v426, %v1748
    %v1828 = vxor.u32 %v1827, 2147483648
    %v1829 = vmul.f32 %v1828, 1.442695
    %v1830 = vpow.pop %v1829
    %v1831 = vadd.f32 %v1830, 1.0
    %v1832 = vrcp.pop %v1831
    %v1833 = vmul.f32 1.0, %v1832
    %v1834 = vadd.f32 %v1817, %v692
    %v1835 = vmul.f32 %v1826, %v1834
    %v1836 = vadd.f32 %v531, %v1835
    %v1837 = vtanh.pop %v1836
    %v1838 = vsub.f32 1.0, %v1833
    %v1839 = vmul.f32 %v1838, %v1837
    %v1840 = vmul.f32 %v1833, %v1678
    %v1841 = vadd.f32 %v1839, %v1840
    %1842 = vmatprep.subr.mxu0 %v640
    %1843 = vmatpush1.msra.mxu0 %v639
    %1844 = vmatprep.subr.mxu0 %v643
    %1845 = vmatpush1.msra.mxu0 %v642
    %1846 = vmatprep.subr.mxu0 %v646
    %1847 = vmatpush1.msra.mxu0 %v645
    %1848 = vmatprep.subr.mxu0 %v649
    %1849 = vmatpush1.msra.mxu0 %v648
    %1850 = vmatprep.subr.mxu0 %v652
    %1851 = vmatpush1.msra.mxu0 %v651
    %1852 = vmatprep.subr.mxu0 %v655
    %1853 = vmatpush1.msra.mxu0 %v654
    %1854 = vmatprep.subr.mxu0 %v658
    %1855 = vmatpush1.msra.mxu0 %v657
    %1856 = vmatprep.subr.mxu0 %v661
    %1857 = vmatpush1.msra.mxu0 %v660
    %1858 = vmatprep.subr.mxu0 %v664
    %1859 = vmatpush1.msra.mxu0 %v663
    %1860 = vmatprep.subr.mxu0 %v667
    %1861 = vmatpush1.msra.mxu0 %v666
    %1862 = vmatprep.subr.mxu0 %v670
    %1863 = vmatpush1.msra.mxu0 %v669
    %1864 = vmatprep.subr.mxu0 %v673
    %1865 = vmatpush1.msra.mxu0 %v672
    %1866 = vmatprep.subr.mxu0 %v676
    %1867 = vmatpush1.msra.mxu0 %v675
    %1868 = vmatprep.subr.mxu0 %v679
    %1869 = vmatpush1.msra.mxu0 %v678
    %1870 = vmatprep.subr.mxu0 %v682
    %1871 = vmatpush1.msra.mxu0 %v681
    %1872 = vmatprep.subr.mxu0 %v685
    %1873 = vmatpush1.msra.mxu0 %v684
    %1874 = vmatprep.subr.mxu0 0.0
    %1875 = vmatpush1.msra.mxu0 0.0
    %1876 = vmatprep.subr.mxu0 0.0
    %1877 = vmatpush1.msra.mxu0 0.0
    %1878 = vmatprep.subr.mxu0 0.0
    %1879 = vmatpush1.msra.mxu0 0.0
    %1880 = vmatprep.subr.mxu0 0.0
    %1881 = vmatpush1.msra.mxu0 0.0
    %1882 = vmatprep.subr.mxu0 0.0
    %1883 = vmatpush1.msra.mxu0 0.0
    %1884 = vmatprep.subr.mxu0 0.0
    %1885 = vmatpush1.msra.mxu0 0.0
    %1886 = vmatprep.subr.mxu0 0.0
    %1887 = vmatpush1.msra.mxu0 0.0
    %1888 = vmatprep.subr.mxu0 0.0
    %1889 = vmatpush1.msra.mxu0 0.0
    %1890 = vmatprep.subr.mxu0 0.0
    %1891 = vmatpush1.msra.mxu0 0.0
    %1892 = vmatprep.subr.mxu0 0.0
    %1893 = vmatpush1.msra.mxu0 0.0
    %1894 = vmatprep.subr.mxu0 0.0
    %1895 = vmatpush1.msra.mxu0 0.0
    %1896 = vmatprep.subr.mxu0 0.0
    %1897 = vmatpush1.msra.mxu0 0.0
    %1898 = vmatprep.subr.mxu0 0.0
    %1899 = vmatpush1.msra.mxu0 0.0
    %1900 = vmatprep.subr.mxu0 0.0
    %1901 = vmatpush1.msra.mxu0 0.0
    %1902 = vmatprep.subr.mxu0 0.0
    %1903 = vmatpush1.msra.mxu0 0.0
    %1904 = vmatprep.subr.mxu0 0.0
    %1905 = vmatpush1.msra.mxu0 0.0
    %1906 = vmatprep.mubr.f32.mxu0 0.0
    %1907 = vmatmul.mubr.f32.gmra.mrb[0].mxu0 %v1841
    %v1908 = vpop.f32.mrb[0].mxu0
    %v1909 = vadd.f32 0.0, %v1908
    %v1910 = vpop.f32.mrb[0].mxu0
    %v1911 = vadd.f32 0.0, %v1910
    %1912 = vdwg.mxu0
    %1913 = vmatprep.subr.mxu0 0.0
    %1914 = vmatpush1.msra.mxu0 %v641
    %1915 = vmatprep.subr.mxu0 0.0
    %1916 = vmatpush1.msra.mxu0 %v644
    %1917 = vmatprep.subr.mxu0 0.0
    %1918 = vmatpush1.msra.mxu0 %v647
    %1919 = vmatprep.subr.mxu0 0.0
    %1920 = vmatpush1.msra.mxu0 %v650
    %1921 = vmatprep.subr.mxu0 0.0
    %1922 = vmatpush1.msra.mxu0 %v653
    %1923 = vmatprep.subr.mxu0 0.0
    %1924 = vmatpush1.msra.mxu0 %v656
    %1925 = vmatprep.subr.mxu0 0.0
    %1926 = vmatpush1.msra.mxu0 %v659
    %1927 = vmatprep.subr.mxu0 0.0
    %1928 = vmatpush1.msra.mxu0 %v662
    %1929 = vmatprep.subr.mxu0 0.0
    %1930 = vmatpush1.msra.mxu0 %v665
    %1931 = vmatprep.subr.mxu0 0.0
    %1932 = vmatpush1.msra.mxu0 %v668
    %1933 = vmatprep.subr.mxu0 0.0
    %1934 = vmatpush1.msra.mxu0 %v671
    %1935 = vmatprep.subr.mxu0 0.0
    %1936 = vmatpush1.msra.mxu0 %v674
    %1937 = vmatprep.subr.mxu0 0.0
    %1938 = vmatpush1.msra.mxu0 %v677
    %1939 = vmatprep.subr.mxu0 0.0
    %1940 = vmatpush1.msra.mxu0 %v680
    %1941 = vmatprep.subr.mxu0 0.0
    %1942 = vmatpush1.msra.mxu0 %v683
    %1943 = vmatprep.subr.mxu0 0.0
    %1944 = vmatpush1.msra.mxu0 %v686
    %1945 = vmatprep.subr.mxu0 0.0
    %1946 = vmatpush1.msra.mxu0 0.0
    %1947 = vmatprep.subr.mxu0 0.0
    %1948 = vmatpush1.msra.mxu0 0.0
    %1949 = vmatprep.subr.mxu0 0.0
    %1950 = vmatpush1.msra.mxu0 0.0
    %1951 = vmatprep.subr.mxu0 0.0
    %1952 = vmatpush1.msra.mxu0 0.0
    %1953 = vmatprep.subr.mxu0 0.0
    %1954 = vmatpush1.msra.mxu0 0.0
    %1955 = vmatprep.subr.mxu0 0.0
    %1956 = vmatpush1.msra.mxu0 0.0
    %1957 = vmatprep.subr.mxu0 0.0
    %1958 = vmatpush1.msra.mxu0 0.0
    %1959 = vmatprep.subr.mxu0 0.0
    %1960 = vmatpush1.msra.mxu0 0.0
    %1961 = vmatprep.subr.mxu0 0.0
    %1962 = vmatpush1.msra.mxu0 0.0
    %1963 = vmatprep.subr.mxu0 0.0
    %1964 = vmatpush1.msra.mxu0 0.0
    %1965 = vmatprep.subr.mxu0 0.0
    %1966 = vmatpush1.msra.mxu0 0.0
    %1967 = vmatprep.subr.mxu0 0.0
    %1968 = vmatpush1.msra.mxu0 0.0
    %1969 = vmatprep.subr.mxu0 0.0
    %1970 = vmatpush1.msra.mxu0 0.0
    %1971 = vmatprep.subr.mxu0 0.0
    %1972 = vmatpush1.msra.mxu0 0.0
    %1973 = vmatprep.subr.mxu0 0.0
    %1974 = vmatpush1.msra.mxu0 0.0
    %1975 = vmatprep.subr.mxu0 0.0
    %1976 = vmatpush1.msra.mxu0 0.0
    %1977 = vmatprep.mubr.f32.mxu0 0.0
    %1978 = vmatmul.mubr.f32.gmra.mrb[0].mxu0 %v1841
    %v1979 = vpop.f32.mrb[0].mxu0
    %v1980 = vadd.f32 0.0, %v1979
    %v1981 = vpop.f32.mrb[0].mxu0
    %1982 = vdwg.mxu0
    %v1983 = vadd.f32 %v430, %v1909
    %v1984 = vxor.u32 %v1983, 2147483648
    %v1985 = vmul.f32 %v1984, 1.442695
    %v1986 = vpow.pop %v1985
    %v1987 = vadd.f32 %v1986, 1.0
    %v1988 = vrcp.pop %v1987
    %v1989 = vmul.f32 1.0, %v1988
    %v1990 = vadd.f32 %v432, %v1911
    %v1991 = vxor.u32 %v1990, 2147483648
    %v1992 = vmul.f32 %v1991, 1.442695
    %v1993 = vpow.pop %v1992
    %v1994 = vadd.f32 %v1993, 1.0
    %v1995 = vrcp.pop %v1994
    %v1996 = vmul.f32 1.0, %v1995
    %v1997 = vadd.f32 %v1980, %v692
    %v1998 = vmul.f32 %v1989, %v1997
    %v1999 = vadd.f32 %v536, %v1998
    %v2000 = vtanh.pop %v1999
    %v2001 = vsub.f32 1.0, %v1996
    %v2002 = vmul.f32 %v2001, %v2000
    %v2003 = vmul.f32 %v1996, %v1841
    %v2004 = vadd.f32 %v2002, %v2003
    %v2005 = vxor.u32 %v538, 2147483648
    %v2006 = vmul.f32 %v2005, 1.442695
    %v2007 = vpow.pop %v2006
    %v2008 = vadd.f32 %v2007, 1.0
    %v2009 = vrcp.pop %v2008
    %v2010 = vmul.f32 1.0, %v2009
    %v2011 = vxor.u32 %v635, 2147483648
    %v2012 = vmul.f32 %v2011, 1.442695
    %v2013 = vpow.pop %v2012
    %v2014 = vadd.f32 %v2013, 1.0
    %v2015 = vrcp.pop %v2014
    %v2016 = vmul.f32 1.0, %v2015
    %v2017 = vmul.f32 %v2010, %v699
    %v2018 = vadd.f32 %v637, %v2017
    %v2019 = vtanh.pop %v2018
    %v2020 = vsub.f32 1.0, %v2016
    %v2021 = vmul.f32 %v2020, %v2019
    %v2022 = vld [vmem:[#allocation5] sm:$0xff]
    %v2023 = vld [vmem:[#allocation5 + $0x8] sm:$0xff]
    %v2024 = vld [vmem:[#allocation5 + $0x10] sm:$0xff]
    %v2025 = vld [vmem:[#allocation5 + $0x18] sm:$0xff]
    %v2026 = vld [vmem:[#allocation5 + $0x20] sm:$0xff]
    %v2027 = vld [vmem:[#allocation5 + $0x28] sm:$0xff]
    %v2028 = vld [vmem:[#allocation5 + $0x30] sm:$0xff]
    %v2029 = vld [vmem:[#allocation5 + $0x38] sm:$0xff]
    %v2030 = vld [vmem:[#allocation5 + $0x40] sm:$0xff]
    %v2031 = vld [vmem:[#allocation5 + $0x48] sm:$0xff]
    %v2032 = vld [vmem:[#allocation5 + $0x50] sm:$0xff]
    %v2033 = vld [vmem:[#allocation5 + $0x58] sm:$0xff]
    %v2034 = vld [vmem:[#allocation5 + $0x60] sm:$0xff]
    %v2035 = vld [vmem:[#allocation5 + $0x68] sm:$0xff]
    %v2036 = vld [vmem:[#allocation5 + $0x70] sm:$0xff]
    %v2037 = vld [vmem:[#allocation5 + $0x78] sm:$0xff]
    %v2038 = vld [vmem:[#allocation5 + $0x80] sm:$0xff]
    %v2039 = vld [vmem:[#allocation5 + $0x88] sm:$0xff]
    %v2040 = vld [vmem:[#allocation5 + $0x90] sm:$0xff]
    %v2041 = vld [vmem:[#allocation5 + $0x98] sm:$0xff]
    %v2042 = vld [vmem:[#allocation5 + $0xa0] sm:$0xff]
    %v2043 = vld [vmem:[#allocation5 + $0xa8] sm:$0xff]
    %v2044 = vld [vmem:[#allocation5 + $0xb0] sm:$0xff]
    %v2045 = vld [vmem:[#allocation5 + $0xb8] sm:$0xff]
    %v2046 = vld [vmem:[#allocation5 + $0xc0] sm:$0xff]
    %v2047 = vld [vmem:[#allocation5 + $0xc8] sm:$0xff]
    %v2048 = vld [vmem:[#allocation5 + $0xd0] sm:$0xff]
    %v2049 = vld [vmem:[#allocation5 + $0xd8] sm:$0xff]
    %v2050 = vld [vmem:[#allocation5 + $0xe0] sm:$0xff]
    %v2051 = vld [vmem:[#allocation5 + $0xe8] sm:$0xff]
    %v2052 = vld [vmem:[#allocation5 + $0xf0] sm:$0xff]
    %v2053 = vld [vmem:[#allocation5 + $0xf8] sm:$0xff]
    %v2054 = vld [vmem:[%s8] sm:$0x1]
    %v2056 = vlaneseq
    %v2057 = vshrl.u32 %v2056, 7
    %v2058 = vsub.s32 0, %v2057
    %v2059 = vrot.slane %v2054, %v2058
    %2061 = vmatprep.subr.mxu0 0.0
    %2062 = vmatpush1.msra.mxu0 %v2022
    %2063 = vmatprep.subr.mxu0 0.0
    %2064 = vmatpush1.msra.mxu0 %v2023
    %2065 = vmatprep.subr.mxu0 0.0
    %2066 = vmatpush1.msra.mxu0 %v2024
    %2067 = vmatprep.subr.mxu0 0.0
    %2068 = vmatpush1.msra.mxu0 %v2025
    %2069 = vmatprep.subr.mxu0 0.0
    %2070 = vmatpush1.msra.mxu0 %v2026
    %2071 = vmatprep.subr.mxu0 0.0
    %2072 = vmatpush1.msra.mxu0 %v2027
    %2073 = vmatprep.subr.mxu0 0.0
    %2074 = vmatpush1.msra.mxu0 %v2028
    %2075 = vmatprep.subr.mxu0 0.0
    %2076 = vmatpush1.msra.mxu0 %v2029
    %2077 = vmatprep.subr.mxu0 0.0
    %2078 = vmatpush1.msra.mxu0 %v2030
    %2079 = vmatprep.subr.mxu0 0.0
    %2080 = vmatpush1.msra.mxu0 %v2031
    %2081 = vmatprep.subr.mxu0 0.0
    %2082 = vmatpush1.msra.mxu0 %v2032
    %2083 = vmatprep.subr.mxu0 0.0
    %2084 = vmatpush1.msra.mxu0 %v2033
    %2085 = vmatprep.subr.mxu0 0.0
    %2086 = vmatpush1.msra.mxu0 %v2034
    %2087 = vmatprep.subr.mxu0 0.0
    %2088 = vmatpush1.msra.mxu0 %v2035
    %2089 = vmatprep.subr.mxu0 0.0
    %2090 = vmatpush1.msra.mxu0 %v2036
    %2091 = vmatprep.subr.mxu0 0.0
    %2092 = vmatpush1.msra.mxu0 %v2037
    %2093 = vmatprep.subr.mxu0 0.0
    %2094 = vmatpush1.msra.mxu0 %v2038
    %2095 = vmatprep.subr.mxu0 0.0
    %2096 = vmatpush1.msra.mxu0 %v2039
    %2097 = vmatprep.subr.mxu0 0.0
    %2098 = vmatpush1.msra.mxu0 %v2040
    %2099 = vmatprep.subr.mxu0 0.0
    %2100 = vmatpush1.msra.mxu0 %v2041
    %2101 = vmatprep.subr.mxu0 0.0
    %2102 = vmatpush1.msra.mxu0 %v2042
    %2103 = vmatprep.subr.mxu0 0.0
    %2104 = vmatpush1.msra.mxu0 %v2043
    %2105 = vmatprep.subr.mxu0 0.0
    %2106 = vmatpush1.msra.mxu0 %v2044
    %2107 = vmatprep.subr.mxu0 0.0
    %2108 = vmatpush1.msra.mxu0 %v2045
    %2109 = vmatprep.subr.mxu0 0.0
    %2110 = vmatpush1.msra.mxu0 %v2046
    %2111 = vmatprep.subr.mxu0 0.0
    %2112 = vmatpush1.msra.mxu0 %v2047
    %2113 = vmatprep.subr.mxu0 0.0
    %2114 = vmatpush1.msra.mxu0 %v2048
    %2115 = vmatprep.subr.mxu0 0.0
    %2116 = vmatpush1.msra.mxu0 %v2049
    %2117 = vmatprep.subr.mxu0 0.0
    %2118 = vmatpush1.msra.mxu0 %v2050
    %2119 = vmatprep.subr.mxu0 0.0
    %2120 = vmatpush1.msra.mxu0 %v2051
    %2121 = vmatprep.subr.mxu0 0.0
    %2122 = vmatpush1.msra.mxu0 %v2052
    %2123 = vmatprep.subr.mxu0 0.0
    %2124 = vmatpush1.msra.mxu0 %v2053
    %2125 = vmatprep.mubr.f32.mxu0 %v2021
    %2126 = vmatmul.mubr.f32.gmra.mrb[0].mxu0 %v2004
    %v2127 = vpop.f32.mrb[0].mxu0
    %v2128 = vadd.f32 %v2059, %v2127
    %v2129 = vpop.f32.mrb[0].mxu0
    %2130 = vdwg.mxu0
    %2131 = vst [vmem:[#allocation7] sm:$0xff] %v2128
    // Predicated region
    $region46: #{tpu_custom_call.1} parent=1 // pred_check
      _
    $region47: #{tpu_custom_call.1} parent=1 // pred_check_branch
      %2133 = sbr.rel (0) target = $region49
    $region48: #{tpu_custom_call.1} parent=1 // pred_region
      %s2135 = ssub.s32 128, 128
      %2136 = vsyncadd [#allocation4], %s2135
      %s2138 = sshll.u32 [#allocation7], 4
      %s2139 = int_to_ptr.vmem [resolvable:$true] %s2138
      %2141 = dma.vmem_to_hbm [thread:$0]  %s2139, 128, %s9, [#allocation4]
    $region49: #{tpu_custom_call.1} parent=1 // pred_fallthru
      _
    // Predicated region
    $region50: #{tpu_custom_call.1} parent=1 // pred_check
      _
    $region51: #{tpu_custom_call.1} parent=1 // pred_check_branch
      %2143 = sbr.rel (0) target = $region53
    $region52: #{tpu_custom_call.1} parent=1 // pred_region
      %2144 = dma.done [#allocation4], 128
    $region53: #{tpu_custom_call.1} parent=1 // pred_fallthru
      _
    %2145 = vsyncpa [#allocation3], 1
    %2146 = vsyncpa [#allocation6], 1
    %2147 = vsyncpa [#allocation4], 1

</llo_original>
